<compile_context>
chip_gen: v5e
topology: v5e:2x2
jax: 0.10.0
libtpu: 0.0.40
codegen_flags: <defaults>
</compile_context>

<pallas_src>
import jax
import jax.numpy as jnp
from jax.experimental import pallas as pl
from jax.experimental.pallas import tpu as pltpu


def _pairwise_inter_kernel(f1_ref, f2_ref, w1a_ref, w1b_ref, b1_ref,
                           w2_ref, b2_ref,
                           o1s_ref, o1o_ref, o2s_ref, o2o_ref):
    # Keep native dtype for the MXU path (bf16 stays bf16; f32 stays f32).
    f1 = f1_ref[...]
    f2 = f2_ref[...]

    # map1: Linear(2D -> H) on cat([f1, f2], dim=1), expressed as two K=D
    # contractions against the two halves of W1 (no concat copy in VMEM).
    h = (jnp.dot(f1, w1a_ref[...], preferred_element_type=jnp.float32)
         + jnp.dot(f2, w1b_ref[...], preferred_element_type=jnp.float32)
         + b1_ref[...])

    # nn.Dropout(p=0.5) -> identity in eval mode.
    # TODO(synk): training-mode dropout would use pltpu.prng_seed / prng_random_bits.

    # map2: Linear(H -> D). Feed the MXU in the weight dtype, accumulate in f32.
    m = jnp.dot(h.astype(w2_ref.dtype), w2_ref[...],
                preferred_element_type=jnp.float32) + b2_ref[...]

    # Elementwise gate / residual path in f32 (EUP sigmoid, VPU mul/add).
    f1f = f1.astype(jnp.float32)
    f2f = f2.astype(jnp.float32)
    g1p = jax.nn.sigmoid(m * f1f) + 1.0     # gate1 + 1
    g2p = jax.nn.sigmoid(m * f2f) + 1.0     # gate2 + 1

    o1s_ref[...] = (g1p * f1f).astype(o1s_ref.dtype)   # features1_self
    o1o_ref[...] = (g2p * f1f).astype(o1o_ref.dtype)   # features1_other
    o2s_ref[...] = (g2p * f2f).astype(o2s_ref.dtype)   # features2_self
    o2o_ref[...] = (g1p * f2f).astype(o2o_ref.dtype)   # features2_other


def _choose_tm(B, tm_max):
    """Batch tile: multiple of 8, minimal padding, >= 2 grid steps when B allows."""
    if B <= 8:
        return 8
    if B < 16:
        return ((B + 7) // 8) * 8          # single step, just round up to a sublane tile
    n_steps = max(2, pl.cdiv(B, tm_max))   # keep both v7x TensorCores busy
    return ((pl.cdiv(B, n_steps) + 7) // 8) * 8


def pairwise_inter(features1, features2, params, *, tm=256,
                   vmem_limit_cap=64 * 1024 * 1024):
    """features1, features2: (B, D). Returns 4 arrays of shape (B, D)."""
    B, D = features1.shape
    w1, b1, w2, b2 = params["w1"], params["b1"], params["w2"], params["b2"]
    H = w1.shape[1]
    assert w1.shape == (2 * D, H)
    assert w2.shape == (H, D)
    assert b1.shape == (1, H) and b2.shape == (1, D)

    # Split W1 once in the wrapper so the kernel never materializes cat([f1, f2]).
    w1a, w1b = w1[:D], w1[D:]

    tm = _choose_tm(B, tm)
    n_steps = pl.cdiv(B, tm)
    B_pad = n_steps * tm
    if B_pad != B:
        pad = B_pad - B
        features1 = jnp.pad(features1, ((0, pad), (0, 0)))
        features2 = jnp.pad(features2, ((0, pad), (0, 0)))

    f_elt = jnp.dtype(features1.dtype).itemsize
    w_elt = jnp.dtype(w1.dtype).itemsize

    # VMEM budget: resident weights (assume double-buffered by the pipeliner),
    # double-buffered feature / output tiles, plus f32 intermediates + margin.
    weight_bytes = (2 * D * H + H * D) * w_elt + (H + D) * 4
    io_bytes = 2 * 6 * tm * D * f_elt          # 2 inputs + 4 outputs, x2 buffers
    work_bytes = 4 * tm * max(D, H) * 4        # h, m, gates in f32
    vmem_limit = 2 * weight_bytes + io_bytes + work_bytes + (4 << 20)
    vmem_limit = int(min(max(vmem_limit, 32 << 20), vmem_limit_cap))

    cost = pl.CostEstimate(
        flops=2 * B_pad * (2 * D * H + H * D),
        transcendentals=2 * B_pad * D,
        bytes_accessed=6 * B_pad * D * f_elt + weight_bytes,
    )

    feat_spec = pl.BlockSpec((tm, D), lambda i: (i, 0))
    out_shape = jax.ShapeDtypeStruct((B_pad, D), features1.dtype)

    grid_spec = pltpu.PrefetchScalarGridSpec(
        num_scalar_prefetch=0,
        grid=(n_steps,),
        in_specs=[
            feat_spec,                                 # features1
            feat_spec,                                 # features2
            pl.BlockSpec((D, H), lambda i: (0, 0)),    # W1a  (resident)
            pl.BlockSpec((D, H), lambda i: (0, 0)),    # W1b  (resident)
            pl.BlockSpec((1, H), lambda i: (0, 0)),    # b1
            pl.BlockSpec((H, D), lambda i: (0, 0)),    # W2   (resident)
            pl.BlockSpec((1, D), lambda i: (0, 0)),    # b2
        ],
        out_specs=[feat_spec, feat_spec, feat_spec, feat_spec],
    )

    outs = pl.pallas_call(
        _pairwise_inter_kernel,
        out_shape=(out_shape, out_shape, out_shape, out_shape),
        grid_spec=grid_spec,
        compiler_params=pltpu.CompilerParams(
            dimension_semantics=("parallel",),
            vmem_limit_bytes=vmem_limit),
        cost_estimate=cost,
    )(features1, features2, w1a, w1b, b1, w2, b2)

    if B_pad != B:
        outs = tuple(o[:B] for o in outs)
    return outs


def init_params(key, in_dim, hid_dim, out_dim, weight_dtype=jnp.float32):
    """Deterministic synthetic init mirroring nn.Linear shapes.

    map1: weight (hid_dim, in_dim), bias (hid_dim,)
    map2: weight (out_dim, hid_dim), bias (out_dim,)
    Stored transposed for the kernel (biases kept f32).
    """
    k1, k2, k3, k4 = jax.random.split(key, 4)
    lim1 = 1.0 / jnp.sqrt(in_dim)
    lim2 = 1.0 / jnp.sqrt(hid_dim)
    w1 = jax.random.uniform(k1, (hid_dim, in_dim), jnp.float32, -lim1, lim1)
    b1 = jax.random.uniform(k2, (hid_dim,), jnp.float32, -lim1, lim1)
    w2 = jax.random.uniform(k3, (out_dim, hid_dim), jnp.float32, -lim2, lim2)
    b2 = jax.random.uniform(k4, (out_dim,), jnp.float32, -lim2, lim2)
    return {
        "w1": w1.T.astype(weight_dtype),        # (in_dim, hid_dim) == (2*D, H)
        "b1": b1.reshape(1, hid_dim),           # (1, H) f32
        "w2": w2.T.astype(weight_dtype),        # (hid_dim, out_dim) == (H, D)
        "b2": b2.reshape(1, out_dim),           # (1, D) f32
    }


def pairwise_inter_ref(f1, f2, params):
    """Pure-JAX reference of the PyTorch forward (dropout = identity)."""
    hi = jax.lax.Precision.HIGHEST
    x = jnp.concatenate([f1, f2], axis=1)
    h = jnp.dot(x, params["w1"].astype(jnp.float32), precision=hi) + params["b1"]
    m = jnp.dot(h, params["w2"].astype(jnp.float32), precision=hi) + params["b2"]
    g1 = jax.nn.sigmoid(m * f1)
    g2 = jax.nn.sigmoid(m * f2)
    return (g1 * f1 + f1, g2 * f1 + f1, g2 * f2 + f2, g1 * f2 + f2)


if __name__ == "__main__":
    # Small shapes consistent with the module: feature dim D == out_dim,
    # concat dim in_dim == 2*D. B is intentionally not a multiple of the tile
    # to exercise the padding / tile-selection path.
    B, D, H = 200, 128, 256          # batch, feature(out_dim), hid_dim
    in_dim = 2 * D

    key = jax.random.PRNGKey(0)
    kp, kf1, kf2 = jax.random.split(key, 3)
    params = init_params(kp, in_dim, H, D)
    features1 = jax.random.normal(kf1, (B, D), jnp.float32)
    features2 = jax.random.normal(kf2, (B, D), jnp.float32)

    outs = pairwise_inter(features1, features2, params)
    outs = jax.block_until_ready(outs)

    refs = pairwise_inter_ref(features1, features2, params)
    for o, r in zip(outs, refs):
        assert o.shape == (B, D)
        assert jnp.allclose(o, r, atol=1e-4, rtol=1e-4), "mismatch vs reference"

    print("KERNEL_OK")
</pallas_src>

<mosaic_0001>
module attributes {stable_mosaic.version = 11 : i64} {
  func.func @_pairwise_inter_kernel(%arg0: i32, %arg1: memref<104x128xf32, #tpu.memory_space<vmem>>, %arg2: memref<104x128xf32, #tpu.memory_space<vmem>>, %arg3: memref<128x256xf32, #tpu.memory_space<vmem>>, %arg4: memref<128x256xf32, #tpu.memory_space<vmem>>, %arg5: memref<1x256xf32, #tpu.memory_space<vmem>>, %arg6: memref<256x128xf32, #tpu.memory_space<vmem>>, %arg7: memref<1x128xf32, #tpu.memory_space<vmem>>, %arg8: memref<104x128xf32, #tpu.memory_space<vmem>>, %arg9: memref<104x128xf32, #tpu.memory_space<vmem>>, %arg10: memref<104x128xf32, #tpu.memory_space<vmem>>, %arg11: memref<104x128xf32, #tpu.memory_space<vmem>>) attributes {dimension_semantics = [#tpu.dimension_semantics<parallel>], iteration_bounds = array<i64: 2>, scalar_prefetch = 0 : i64, scratch_operands = 0 : i64, tpu.core_type = #tpu.core_type<tc>, window_params = [{transform_indices = @transform_0, window_bounds = array<i64: 104, 128>}, {transform_indices = @transform_1, window_bounds = array<i64: 104, 128>}, {pipeline_mode = #tpu.pipeline_mode<synchronous>, transform_indices = @transform_2, window_bounds = array<i64: 128, 256>}, {pipeline_mode = #tpu.pipeline_mode<synchronous>, transform_indices = @transform_3, window_bounds = array<i64: 128, 256>}, {pipeline_mode = #tpu.pipeline_mode<synchronous>, transform_indices = @transform_4, window_bounds = array<i64: 1, 256>}, {pipeline_mode = #tpu.pipeline_mode<synchronous>, transform_indices = @transform_5, window_bounds = array<i64: 256, 128>}, {pipeline_mode = #tpu.pipeline_mode<synchronous>, transform_indices = @transform_6, window_bounds = array<i64: 1, 128>}, {transform_indices = @transform_7, window_bounds = array<i64: 104, 128>}, {transform_indices = @transform_8, window_bounds = array<i64: 104, 128>}, {transform_indices = @transform_9, window_bounds = array<i64: 104, 128>}, {transform_indices = @transform_10, window_bounds = array<i64: 104, 128>}]} {
    %c0 = arith.constant 0 : index
    %c0_0 = arith.constant 0 : index
    %0 = vector.load %arg1[%c0, %c0_0] : memref<104x128xf32, #tpu.memory_space<vmem>>, vector<104x128xf32>
    %c0_1 = arith.constant 0 : index
    %c0_2 = arith.constant 0 : index
    %1 = vector.load %arg2[%c0_1, %c0_2] : memref<104x128xf32, #tpu.memory_space<vmem>>, vector<104x128xf32>
    %c0_3 = arith.constant 0 : index
    %c0_4 = arith.constant 0 : index
    %2 = vector.load %arg3[%c0_3, %c0_4] : memref<128x256xf32, #tpu.memory_space<vmem>>, vector<128x256xf32>
    %cst = arith.constant dense<0.000000e+00> : vector<104x256xf32>
    %3 = tpu.matmul %0, %2, %cst {dimension_numbers = #tpu.dot_dimension_numbers<[1], [0], [0], [1], [0, 0, 1, 1], [], []>} : vector<104x128xf32>, vector<128x256xf32>, vector<104x256xf32> -> vector<104x256xf32>
    %c0_5 = arith.constant 0 : index
    %c0_6 = arith.constant 0 : index
    %4 = vector.load %arg4[%c0_5, %c0_6] : memref<128x256xf32, #tpu.memory_space<vmem>>, vector<128x256xf32>
    %cst_7 = arith.constant dense<0.000000e+00> : vector<104x256xf32>
    %5 = tpu.matmul %1, %4, %cst_7 {dimension_numbers = #tpu.dot_dimension_numbers<[1], [0], [0], [1], [0, 0, 1, 1], [], []>} : vector<104x128xf32>, vector<128x256xf32>, vector<104x256xf32> -> vector<104x256xf32>
    %6 = arith.addf %3, %5 : vector<104x256xf32>
    %c0_8 = arith.constant 0 : index
    %c0_9 = arith.constant 0 : index
    %7 = vector.load %arg5[%c0_8, %c0_9] : memref<1x256xf32, #tpu.memory_space<vmem>>, vector<1x256xf32>
    %8 = vector.broadcast %7 : vector<1x256xf32> to vector<104x256xf32>
    %9 = arith.addf %6, %8 : vector<104x256xf32>
    %c0_10 = arith.constant 0 : index
    %c0_11 = arith.constant 0 : index
    %10 = vector.load %arg6[%c0_10, %c0_11] : memref<256x128xf32, #tpu.memory_space<vmem>>, vector<256x128xf32>
    %cst_12 = arith.constant dense<0.000000e+00> : vector<104x128xf32>
    %11 = tpu.matmul %9, %10, %cst_12 {dimension_numbers = #tpu.dot_dimension_numbers<[1], [0], [0], [1], [0, 0, 1, 1], [], []>} : vector<104x256xf32>, vector<256x128xf32>, vector<104x128xf32> -> vector<104x128xf32>
    %c0_13 = arith.constant 0 : index
    %c0_14 = arith.constant 0 : index
    %12 = vector.load %arg7[%c0_13, %c0_14] : memref<1x128xf32, #tpu.memory_space<vmem>>, vector<1x128xf32>
    %13 = vector.broadcast %12 : vector<1x128xf32> to vector<104x128xf32>
    %14 = arith.addf %11, %13 : vector<104x128xf32>
    %15 = arith.mulf %14, %0 : vector<104x128xf32>
    %16 = arith.negf %15 : vector<104x128xf32>
    %17 = math.exp %16 : vector<104x128xf32>
    %cst_15 = arith.constant 1.000000e+00 : f32
    %18 = vector.broadcast %cst_15 : f32 to vector<104x128xf32>
    %19 = arith.addf %18, %17 : vector<104x128xf32>
    %20 = arith.divf %18, %19 : vector<104x128xf32>
    %cst_16 = arith.constant 1.000000e+00 : f32
    %21 = vector.broadcast %cst_16 : f32 to vector<104x128xf32>
    %22 = arith.addf %20, %21 : vector<104x128xf32>
    %23 = arith.mulf %14, %1 : vector<104x128xf32>
    %24 = arith.negf %23 : vector<104x128xf32>
    %25 = math.exp %24 : vector<104x128xf32>
    %cst_17 = arith.constant 1.000000e+00 : f32
    %26 = vector.broadcast %cst_17 : f32 to vector<104x128xf32>
    %27 = arith.addf %26, %25 : vector<104x128xf32>
    %28 = arith.divf %26, %27 : vector<104x128xf32>
    %cst_18 = arith.constant 1.000000e+00 : f32
    %29 = vector.broadcast %cst_18 : f32 to vector<104x128xf32>
    %30 = arith.addf %28, %29 : vector<104x128xf32>
    %31 = arith.mulf %22, %0 : vector<104x128xf32>
    %c0_19 = arith.constant 0 : index
    %c0_20 = arith.constant 0 : index
    %32 = vector.load %arg8[%c0_19, %c0_20] : memref<104x128xf32, #tpu.memory_space<vmem>>, vector<104x128xf32>
    tpu.vector_store %arg8[%c0_19, %c0_20], %31 {strides = array<i32>} : memref<104x128xf32, #tpu.memory_space<vmem>>, vector<104x128xf32>,
    %33 = arith.mulf %30, %0 : vector<104x128xf32>
    %c0_21 = arith.constant 0 : index
    %c0_22 = arith.constant 0 : index
    %34 = vector.load %arg9[%c0_21, %c0_22] : memref<104x128xf32, #tpu.memory_space<vmem>>, vector<104x128xf32>
    tpu.vector_store %arg9[%c0_21, %c0_22], %33 {strides = array<i32>} : memref<104x128xf32, #tpu.memory_space<vmem>>, vector<104x128xf32>,
    %35 = arith.mulf %30, %1 : vector<104x128xf32>
    %c0_23 = arith.constant 0 : index
    %c0_24 = arith.constant 0 : index
    %36 = vector.load %arg10[%c0_23, %c0_24] : memref<104x128xf32, #tpu.memory_space<vmem>>, vector<104x128xf32>
    tpu.vector_store %arg10[%c0_23, %c0_24], %35 {strides = array<i32>} : memref<104x128xf32, #tpu.memory_space<vmem>>, vector<104x128xf32>,
    %37 = arith.mulf %22, %1 : vector<104x128xf32>
    %c0_25 = arith.constant 0 : index
    %c0_26 = arith.constant 0 : index
    %38 = vector.load %arg11[%c0_25, %c0_26] : memref<104x128xf32, #tpu.memory_space<vmem>>, vector<104x128xf32>
    tpu.vector_store %arg11[%c0_25, %c0_26], %37 {strides = array<i32>} : memref<104x128xf32, #tpu.memory_space<vmem>>, vector<104x128xf32>,
    return
  }
  func.func @transform_0(%arg0: i32) -> (i32, i32) {
    %c0_i32 = arith.constant 0 : i32
    %c0_i32_0 = arith.constant 0 : i32
    return %arg0, %c0_i32 : i32, i32
  }
  func.func @transform_1(%arg0: i32) -> (i32, i32) {
    %c0_i32 = arith.constant 0 : i32
    %c0_i32_0 = arith.constant 0 : i32
    return %arg0, %c0_i32 : i32, i32
  }
  func.func @transform_2(%arg0: i32) -> (i32, i32) {
    %c0_i32 = arith.constant 0 : i32
    %c0_i32_0 = arith.constant 0 : i32
    %c0_i32_1 = arith.constant 0 : i32
    return %c0_i32, %c0_i32_0 : i32, i32
  }
  func.func @transform_3(%arg0: i32) -> (i32, i32) {
    %c0_i32 = arith.constant 0 : i32
    %c0_i32_0 = arith.constant 0 : i32
    %c0_i32_1 = arith.constant 0 : i32
    return %c0_i32, %c0_i32_0 : i32, i32
  }
  func.func @transform_4(%arg0: i32) -> (i32, i32) {
    %c0_i32 = arith.constant 0 : i32
    %c0_i32_0 = arith.constant 0 : i32
    %c0_i32_1 = arith.constant 0 : i32
    return %c0_i32, %c0_i32_0 : i32, i32
  }
  func.func @transform_5(%arg0: i32) -> (i32, i32) {
    %c0_i32 = arith.constant 0 : i32
    %c0_i32_0 = arith.constant 0 : i32
    %c0_i32_1 = arith.constant 0 : i32
    return %c0_i32, %c0_i32_0 : i32, i32
  }
  func.func @transform_6(%arg0: i32) -> (i32, i32) {
    %c0_i32 = arith.constant 0 : i32
    %c0_i32_0 = arith.constant 0 : i32
    %c0_i32_1 = arith.constant 0 : i32
    return %c0_i32, %c0_i32_0 : i32, i32
  }
  func.func @transform_7(%arg0: i32) -> (i32, i32) {
    %c0_i32 = arith.constant 0 : i32
    %c0_i32_0 = arith.constant 0 : i32
    return %arg0, %c0_i32 : i32, i32
  }
  func.func @transform_8(%arg0: i32) -> (i32, i32) {
    %c0_i32 = arith.constant 0 : i32
    %c0_i32_0 = arith.constant 0 : i32
    return %arg0, %c0_i32 : i32, i32
  }
  func.func @transform_9(%arg0: i32) -> (i32, i32) {
    %c0_i32 = arith.constant 0 : i32
    %c0_i32_0 = arith.constant 0 : i32
    return %arg0, %c0_i32 : i32, i32
  }
  func.func @transform_10(%arg0: i32) -> (i32, i32) {
    %c0_i32 = arith.constant 0 : i32
    %c0_i32_0 = arith.constant 0 : i32
    return %arg0, %c0_i32 : i32, i32
  }
}

</mosaic_0001>

<llo_original>
// kernel: tpu_custom_call.1
$region0: #{tpu_custom_call.1}
  #allocation0 [shape = 'u32[]', space=smem, size = 0x4, offset = 0x4, fixed_abs, tag = 'smem constant byte address 0x4 - core index']
  #allocation1 [shape = 'u32[72,128]{1,0:T(1,128)}', space=vmem, size = 0x9000, scoped, tag = 'internal scratch']
  %s0 = inlined_call_operand.hbm [shape: f32[208,128], index: 0, kind: input, shape index: {}]
  %s1 = inlined_call_operand.hbm [shape: f32[208,128], index: 1, kind: input, shape index: {}]
  %s2 = inlined_call_operand.hbm [shape: f32[128,256], index: 2, kind: input, shape index: {}]
  %s3 = inlined_call_operand.hbm [shape: f32[128,256], index: 3, kind: input, shape index: {}]
  %s4 = inlined_call_operand.vmem [shape: f32[1,256], index: 4, kind: input, shape index: {}]
  %s5 = inlined_call_operand.hbm [shape: f32[256,128], index: 5, kind: input, shape index: {}]
  %s6 = inlined_call_operand.vmem [shape: f32[1,128], index: 6, kind: input, shape index: {}]
  %s7 = inlined_call_operand.hbm [shape: f32[208,128], index: 7, kind: output, shape index: {0}]
  %s8 = inlined_call_operand.hbm [shape: f32[208,128], index: 8, kind: output, shape index: {1}]
  %s9 = inlined_call_operand.hbm [shape: f32[208,128], index: 9, kind: output, shape index: {2}]
  %s10 = inlined_call_operand.hbm [shape: f32[208,128], index: 10, kind: output, shape index: {3}]
  %11 = xla_tuple %s7, %s8, %s9, %s10
  %s12 = sld [smem:[#allocation0]]
  $region105: #{tpu_custom_call.1} parent=0
    _
  %s14 = ssub.s32 1, %s12
  %s15 = scalar_select 0, %s14, %s12
  $region1: #{tpu_custom_call.1} parent=0
    #allocation2 [shape = 'u8[106496]{0}', space=vmem, size = 0x1a000, scoped, tag = 'input window, operand 0']
    #allocation3 [shape = 's32[2]{0}', space=sflag, size = 0x8, scoped, tag = 'scoped memory for tpu_custom_call.1']
    #allocation4 [shape = 's32[2]{0}', space=sflag, size = 0x8, scoped, tag = 'scoped memory for tpu_custom_call.1']
    #allocation5 [shape = 'u8[106496]{0}', space=vmem, size = 0x1a000, scoped, tag = 'input window, operand 1']
    #allocation6 [shape = 's32[2]{0}', space=sflag, size = 0x8, scoped, tag = 'scoped memory for tpu_custom_call.1']
    #allocation7 [shape = 'u8[131072]{0}', space=vmem, size = 0x20000, scoped, tag = 'input window, operand 2, single buffered']
    #allocation8 [shape = 'u8[131072]{0}', space=vmem, size = 0x20000, scoped, tag = 'input window, operand 3, single buffered']
    #allocation9 [shape = 's32[1]{0}', space=sflag, size = 0x4, scoped, tag = 'scoped memory for tpu_custom_call.1']
    #allocation10 [shape = 'u8[131072]{0}', space=vmem, size = 0x20000, scoped, tag = 'input window, operand 5, single buffered']
    #allocation11 [shape = 'u8[106496]{0}', space=vmem, size = 0x1a000, scoped, tag = 'output window, operand 0']
    #allocation12 [shape = 'u8[106496]{0}', space=vmem, size = 0x1a000, scoped, tag = 'output window, operand 1']
    #allocation13 [shape = 's32[2]{0}', space=sflag, size = 0x8, scoped, tag = 'scoped memory for tpu_custom_call.1']
    #allocation14 [shape = 'u8[106496]{0}', space=vmem, size = 0x1a000, scoped, tag = 'output window, operand 2']
    #allocation15 [shape = 'u8[106496]{0}', space=vmem, size = 0x1a000, scoped, tag = 'output window, operand 3']
    #allocation16 [shape = 's32[2]{0}', space=sflag, size = 0x8, scoped, tag = 'scoped memory for tpu_custom_call.1']
    %16 = vsyncpa [#allocation3], 0
    %s17 = scalar_lea.sflag [#allocation3], 1
    %18 = vsyncpa %s17, 0
    %19 = vsyncpa [#allocation6], 0
    %s20 = scalar_lea.sflag [#allocation6], 1
    %21 = vsyncpa %s20, 0
    %22 = vsyncpa [#allocation9], 0
    %23 = vsyncpa [#allocation4], 0
    %s24 = scalar_lea.sflag [#allocation4], 1
    %25 = vsyncpa %s24, 0
    %26 = vsyncpa [#allocation13], 0
    %s27 = scalar_lea.sflag [#allocation13], 1
    %28 = vsyncpa %s27, 0
    %29 = vsyncpa [#allocation16], 0
    %s30 = scalar_lea.sflag [#allocation16], 1
    %31 = vsyncpa %s30, 0
    loop: start=0, step=1, limit=4
    $region2: #{tpu_custom_call.1} parent=1 // loop_pre_header
      _
    $region3: #{tpu_custom_call.1} parent=1 // loop_header
      %s33 = sphi 0, %s37
      %p34 = scmp.ge.s32.totalorder %s33, 4
      %s43 = sphi 0, %s45
      %s46 = sphi 0, %s43
      %s47 = sphi 0, %s46
      %s63 = sphi 0, %s47
      %s69 = sphi 0, %s71
      %s72 = sphi 0, %s69
      %s73 = sphi 0, %s72
      %s89 = sphi 0, %s73
      %s93 = sphi 0, %s93
      %s95 = sphi 0, %s93
      %s96 = sphi 0, %s95
      %s110 = sphi 0, %s96
      %s114 = sphi 0, %s114
      %s116 = sphi 0, %s114
      %s117 = sphi 0, %s116
      %s131 = sphi 0, %s117
      %s135 = sphi 0, %s135
      %s137 = sphi 0, %s135
      %s138 = sphi 0, %s137
      %s152 = sphi 0, %s138
      %s156 = sphi 0, %s156
      %s158 = sphi 0, %s156
      %s159 = sphi 0, %s158
      %s173 = sphi 0, %s159
      %s177 = sphi 0, %s177
      %s179 = sphi 0, %s177
      %s180 = sphi 0, %s179
      %s194 = sphi 0, %s180
      %s200 = sphi 0, %s202
      %s203 = sphi 0, %s200
      %s204 = sphi 0, %s203
      %s220 = sphi 0, %s204
      %s226 = sphi 0, %s228
      %s229 = sphi 0, %s226
      %s230 = sphi 0, %s229
      %s246 = sphi 0, %s230
      %s252 = sphi 0, %s254
      %s255 = sphi 0, %s252
      %s256 = sphi 0, %s255
      %s272 = sphi 0, %s256
      %s278 = sphi 0, %s280
      %s281 = sphi 0, %s278
      %s282 = sphi 0, %s281
      %s298 = sphi 0, %s282
    $region4: #{tpu_custom_call.1} parent=1 // loop_header_branch
      %36 = sbr.rel (%p34) target = $region8
    $region5: #{tpu_custom_call.1} parent=1 // loop_body
      %s38 = ssub.s32 %s33, 1
      %s39 = ssub.s32 %s33, 2
      %s40 = sadd.s32 %s33, 1
      %s41 = ssub.s32 %s33, %s40
      %p42 = scmp.eq.s32.totalorder %s41, 0
      %s44 = sadd.s32 %s43, 1
      %s45 = scalar_select %p42, %s43, %s44
      %p48 = pneg %p42
      %p49 = scmp.eq.s32.totalorder %s33, 1
      %p50 = por %p48, %p49
      %p51 = scmp.ne.s32.totalorder %s43, %s46
      %p52 = scmp.eq.s32.totalorder %s33, 0
      %p53 = por %p51, %p52
      %p54 = scmp.ne.s32.totalorder %s43, %s46
      %p55 = scmp.eq.s32.totalorder %s38, 1
      %p56 = por %p54, %p55
      %p57 = scmp.ne.s32.totalorder %s46, %s47
      %p58 = scmp.eq.s32.totalorder %s38, 0
      %p59 = por %p57, %p58
      %p60 = scmp.ne.s32.totalorder %s46, %s47
      %p61 = scmp.eq.s32.totalorder %s39, 1
      %p62 = por %p60, %p61
      %p64 = scmp.ne.s32.totalorder %s47, %s63
      %p65 = scmp.eq.s32.totalorder %s39, 0
      %p66 = por %p64, %p65
      %s67 = ssub.s32 %s33, %s40
      %p68 = scmp.eq.s32.totalorder %s67, 0
      %s70 = sadd.s32 %s69, 1
      %s71 = scalar_select %p68, %s69, %s70
      %p74 = pneg %p68
      %p75 = scmp.eq.s32.totalorder %s33, 1
      %p76 = por %p74, %p75
      %p77 = scmp.ne.s32.totalorder %s69, %s72
      %p78 = scmp.eq.s32.totalorder %s33, 0
      %p79 = por %p77, %p78
      %p80 = scmp.ne.s32.totalorder %s69, %s72
      %p81 = scmp.eq.s32.totalorder %s38, 1
      %p82 = por %p80, %p81
      %p83 = scmp.ne.s32.totalorder %s72, %s73
      %p84 = scmp.eq.s32.totalorder %s38, 0
      %p85 = por %p83, %p84
      %p86 = scmp.ne.s32.totalorder %s72, %s73
      %p87 = scmp.eq.s32.totalorder %s39, 1
      %p88 = por %p86, %p87
      %p90 = scmp.ne.s32.totalorder %s73, %s89
      %p91 = scmp.eq.s32.totalorder %s39, 0
      %p92 = por %p90, %p91
      %s94 = sadd.s32 %s93, 1
      %p97 = scmp.eq.s32.totalorder %s33, 1
      %p98 = scmp.ne.s32.totalorder %s93, %s95
      %p99 = scmp.eq.s32.totalorder %s33, 0
      %p100 = por %p98, %p99
      %p101 = scmp.ne.s32.totalorder %s93, %s95
      %p102 = scmp.eq.s32.totalorder %s38, 1
      %p103 = por %p101, %p102
      %p104 = scmp.ne.s32.totalorder %s95, %s96
      %p105 = scmp.eq.s32.totalorder %s38, 0
      %p106 = por %p104, %p105
      %p107 = scmp.ne.s32.totalorder %s95, %s96
      %p108 = scmp.eq.s32.totalorder %s39, 1
      %p109 = por %p107, %p108
      %p111 = scmp.ne.s32.totalorder %s96, %s110
      %p112 = scmp.eq.s32.totalorder %s39, 0
      %p113 = por %p111, %p112
      %s115 = sadd.s32 %s114, 1
      %p118 = scmp.eq.s32.totalorder %s33, 1
      %p119 = scmp.ne.s32.totalorder %s114, %s116
      %p120 = scmp.eq.s32.totalorder %s33, 0
      %p121 = por %p119, %p120
      %p122 = scmp.ne.s32.totalorder %s114, %s116
      %p123 = scmp.eq.s32.totalorder %s38, 1
      %p124 = por %p122, %p123
      %p125 = scmp.ne.s32.totalorder %s116, %s117
      %p126 = scmp.eq.s32.totalorder %s38, 0
      %p127 = por %p125, %p126
      %p128 = scmp.ne.s32.totalorder %s116, %s117
      %p129 = scmp.eq.s32.totalorder %s39, 1
      %p130 = por %p128, %p129
      %p132 = scmp.ne.s32.totalorder %s117, %s131
      %p133 = scmp.eq.s32.totalorder %s39, 0
      %p134 = por %p132, %p133
      %s136 = sadd.s32 %s135, 1
      %p139 = scmp.eq.s32.totalorder %s33, 1
      %p140 = scmp.ne.s32.totalorder %s135, %s137
      %p141 = scmp.eq.s32.totalorder %s33, 0
      %p142 = por %p140, %p141
      %p143 = scmp.ne.s32.totalorder %s135, %s137
      %p144 = scmp.eq.s32.totalorder %s38, 1
      %p145 = por %p143, %p144
      %p146 = scmp.ne.s32.totalorder %s137, %s138
      %p147 = scmp.eq.s32.totalorder %s38, 0
      %p148 = por %p146, %p147
      %p149 = scmp.ne.s32.totalorder %s137, %s138
      %p150 = scmp.eq.s32.totalorder %s39, 1
      %p151 = por %p149, %p150
      %p153 = scmp.ne.s32.totalorder %s138, %s152
      %p154 = scmp.eq.s32.totalorder %s39, 0
      %p155 = por %p153, %p154
      %s157 = sadd.s32 %s156, 1
      %p160 = scmp.eq.s32.totalorder %s33, 1
      %p161 = scmp.ne.s32.totalorder %s156, %s158
      %p162 = scmp.eq.s32.totalorder %s33, 0
      %p163 = por %p161, %p162
      %p164 = scmp.ne.s32.totalorder %s156, %s158
      %p165 = scmp.eq.s32.totalorder %s38, 1
      %p166 = por %p164, %p165
      %p167 = scmp.ne.s32.totalorder %s158, %s159
      %p168 = scmp.eq.s32.totalorder %s38, 0
      %p169 = por %p167, %p168
      %p170 = scmp.ne.s32.totalorder %s158, %s159
      %p171 = scmp.eq.s32.totalorder %s39, 1
      %p172 = por %p170, %p171
      %p174 = scmp.ne.s32.totalorder %s159, %s173
      %p175 = scmp.eq.s32.totalorder %s39, 0
      %p176 = por %p174, %p175
      %s178 = sadd.s32 %s177, 1
      %p181 = scmp.eq.s32.totalorder %s33, 1
      %p182 = scmp.ne.s32.totalorder %s177, %s179
      %p183 = scmp.eq.s32.totalorder %s33, 0
      %p184 = por %p182, %p183
      %p185 = scmp.ne.s32.totalorder %s177, %s179
      %p186 = scmp.eq.s32.totalorder %s38, 1
      %p187 = por %p185, %p186
      %p188 = scmp.ne.s32.totalorder %s179, %s180
      %p189 = scmp.eq.s32.totalorder %s38, 0
      %p190 = por %p188, %p189
      %p191 = scmp.ne.s32.totalorder %s179, %s180
      %p192 = scmp.eq.s32.totalorder %s39, 1
      %p193 = por %p191, %p192
      %p195 = scmp.ne.s32.totalorder %s180, %s194
      %p196 = scmp.eq.s32.totalorder %s39, 0
      %p197 = por %p195, %p196
      %s198 = ssub.s32 %s33, %s40
      %p199 = scmp.eq.s32.totalorder %s198, 0
      %s201 = sadd.s32 %s200, 1
      %s202 = scalar_select %p199, %s200, %s201
      %p205 = pneg %p199
      %p206 = scmp.eq.s32.totalorder %s33, 1
      %p207 = por %p205, %p206
      %p208 = scmp.ne.s32.totalorder %s200, %s203
      %p209 = scmp.eq.s32.totalorder %s33, 0
      %p210 = por %p208, %p209
      %p211 = scmp.ne.s32.totalorder %s200, %s203
      %p212 = scmp.eq.s32.totalorder %s38, 1
      %p213 = por %p211, %p212
      %p214 = scmp.ne.s32.totalorder %s203, %s204
      %p215 = scmp.eq.s32.totalorder %s38, 0
      %p216 = por %p214, %p215
      %p217 = scmp.ne.s32.totalorder %s203, %s204
      %p218 = scmp.eq.s32.totalorder %s39, 1
      %p219 = por %p217, %p218
      %p221 = scmp.ne.s32.totalorder %s204, %s220
      %p222 = scmp.eq.s32.totalorder %s39, 0
      %p223 = por %p221, %p222
      %s224 = ssub.s32 %s33, %s40
      %p225 = scmp.eq.s32.totalorder %s224, 0
      %s227 = sadd.s32 %s226, 1
      %s228 = scalar_select %p225, %s226, %s227
      %p231 = pneg %p225
      %p232 = scmp.eq.s32.totalorder %s33, 1
      %p233 = por %p231, %p232
      %p234 = scmp.ne.s32.totalorder %s226, %s229
      %p235 = scmp.eq.s32.totalorder %s33, 0
      %p236 = por %p234, %p235
      %p237 = scmp.ne.s32.totalorder %s226, %s229
      %p238 = scmp.eq.s32.totalorder %s38, 1
      %p239 = por %p237, %p238
      %p240 = scmp.ne.s32.totalorder %s229, %s230
      %p241 = scmp.eq.s32.totalorder %s38, 0
      %p242 = por %p240, %p241
      %p243 = scmp.ne.s32.totalorder %s229, %s230
      %p244 = scmp.eq.s32.totalorder %s39, 1
      %p245 = por %p243, %p244
      %p247 = scmp.ne.s32.totalorder %s230, %s246
      %p248 = scmp.eq.s32.totalorder %s39, 0
      %p249 = por %p247, %p248
      %s250 = ssub.s32 %s33, %s40
      %p251 = scmp.eq.s32.totalorder %s250, 0
      %s253 = sadd.s32 %s252, 1
      %s254 = scalar_select %p251, %s252, %s253
      %p257 = pneg %p251
      %p258 = scmp.eq.s32.totalorder %s33, 1
      %p259 = por %p257, %p258
      %p260 = scmp.ne.s32.totalorder %s252, %s255
      %p261 = scmp.eq.s32.totalorder %s33, 0
      %p262 = por %p260, %p261
      %p263 = scmp.ne.s32.totalorder %s252, %s255
      %p264 = scmp.eq.s32.totalorder %s38, 1
      %p265 = por %p263, %p264
      %p266 = scmp.ne.s32.totalorder %s255, %s256
      %p267 = scmp.eq.s32.totalorder %s38, 0
      %p268 = por %p266, %p267
      %p269 = scmp.ne.s32.totalorder %s255, %s256
      %p270 = scmp.eq.s32.totalorder %s39, 1
      %p271 = por %p269, %p270
      %p273 = scmp.ne.s32.totalorder %s256, %s272
      %p274 = scmp.eq.s32.totalorder %s39, 0
      %p275 = por %p273, %p274
      %s276 = ssub.s32 %s33, %s40
      %p277 = scmp.eq.s32.totalorder %s276, 0
      %s279 = sadd.s32 %s278, 1
      %s280 = scalar_select %p277, %s278, %s279
      %p283 = pneg %p277
      %p284 = scmp.eq.s32.totalorder %s33, 1
      %p285 = por %p283, %p284
      %p286 = scmp.ne.s32.totalorder %s278, %s281
      %p287 = scmp.eq.s32.totalorder %s33, 0
      %p288 = por %p286, %p287
      %p289 = scmp.ne.s32.totalorder %s278, %s281
      %p290 = scmp.eq.s32.totalorder %s38, 1
      %p291 = por %p289, %p290
      %p292 = scmp.ne.s32.totalorder %s281, %s282
      %p293 = scmp.eq.s32.totalorder %s38, 0
      %p294 = por %p292, %p293
      %p295 = scmp.ne.s32.totalorder %s281, %s282
      %p296 = scmp.eq.s32.totalorder %s39, 1
      %p297 = por %p295, %p296
      %p299 = scmp.ne.s32.totalorder %s282, %s298
      %p300 = scmp.eq.s32.totalorder %s39, 0
      %p301 = por %p299, %p300
      %p302 = scmp.le.s32.totalorder 1, %s33
      %p303 = scmp.lt.s32.totalorder %s33, 3
      %p304 = pnand %p302, %p303
      %p305 = pneg %p304
      // Predicated region
      $region9: #{tpu_custom_call.1} parent=5 // pred_check
        _
      $region10: #{tpu_custom_call.1} parent=5 // pred_check_branch
        %307 = sbr.rel (%p304) target = $region12
      $region11: #{tpu_custom_call.1} parent=5 // pred_region
        %s308 = ssub.s32 %s33, 1
        // Predicated region
        $region13: #{tpu_custom_call.1} parent=11 // pred_check
          %p309 = pneg %p106
        $region14: #{tpu_custom_call.1} parent=11 // pred_check_branch
          %311 = sbr.rel (%p309) target = $region16
        $region15: #{tpu_custom_call.1} parent=11 // pred_region
          %313 = vsyncadd [#allocation6], 0
          %s314 = sshll.u32 %s2, 4
          %s315 = int_to_ptr.hbm [resolvable:$true] %s314
          %s316 = sshll.u32 [#allocation7], 4
          %s317 = int_to_ptr.vmem [resolvable:$true] %s316
          %322 = dma.hbm_to_vmem [thread:$0]  %s315, 4096, %s317, [#allocation6], 256, 256, 16
        $region16: #{tpu_custom_call.1} parent=11 // pred_fallthru
          _
        // Predicated region
        $region17: #{tpu_custom_call.1} parent=11 // pred_check
          %p323 = pneg %p127
        $region18: #{tpu_custom_call.1} parent=11 // pred_check_branch
          %325 = sbr.rel (%p323) target = $region20
        $region19: #{tpu_custom_call.1} parent=11 // pred_region
          %327 = vsyncadd [#allocation9], 0
          %s328 = sshll.u32 %s3, 4
          %s329 = int_to_ptr.hbm [resolvable:$true] %s328
          %s330 = sshll.u32 [#allocation8], 4
          %s331 = int_to_ptr.vmem [resolvable:$true] %s330
          %336 = dma.hbm_to_vmem [thread:$0]  %s329, 4096, %s331, [#allocation9], 256, 256, 16
        $region20: #{tpu_custom_call.1} parent=11 // pred_fallthru
          _
        // Predicated region
        $region21: #{tpu_custom_call.1} parent=11 // pred_check
          %p337 = pneg %p148
        $region22: #{tpu_custom_call.1} parent=11 // pred_check_branch
          %339 = sbr.rel (%p337) target = $region24
        $region23: #{tpu_custom_call.1} parent=11 // pred_region
          _
        $region24: #{tpu_custom_call.1} parent=11 // pred_fallthru
          _
        // Predicated region
        $region25: #{tpu_custom_call.1} parent=11 // pred_check
          %p340 = pneg %p169
        $region26: #{tpu_custom_call.1} parent=11 // pred_check_branch
          %342 = sbr.rel (%p340) target = $region28
        $region27: #{tpu_custom_call.1} parent=11 // pred_region
          %344 = vsyncadd [#allocation9], 0
          %s345 = sshll.u32 %s5, 4
          %s346 = int_to_ptr.hbm [resolvable:$true] %s345
          %s347 = sshll.u32 [#allocation10], 4
          %s348 = int_to_ptr.vmem [resolvable:$true] %s347
          %353 = dma.hbm_to_vmem [thread:$0]  %s346, 4096, %s348, [#allocation9], 128, 128, 8
        $region28: #{tpu_custom_call.1} parent=11 // pred_fallthru
          _
        // Predicated region
        $region29: #{tpu_custom_call.1} parent=11 // pred_check
          %p354 = pneg %p190
        $region30: #{tpu_custom_call.1} parent=11 // pred_check_branch
          %356 = sbr.rel (%p354) target = $region32
        $region31: #{tpu_custom_call.1} parent=11 // pred_region
          _
        $region32: #{tpu_custom_call.1} parent=11 // pred_fallthru
          _
      $region12: #{tpu_custom_call.1} parent=5 // pred_fallthru
        _
      %p357 = scmp.lt.s32.totalorder %s33, 2
      // Predicated region
      $region33: #{tpu_custom_call.1} parent=5 // pred_check
        %p358 = pneg %p357
      $region34: #{tpu_custom_call.1} parent=5 // pred_check_branch
        %360 = sbr.rel (%p358) target = $region36
      $region35: #{tpu_custom_call.1} parent=5 // pred_region
        // Predicated region
        $region37: #{tpu_custom_call.1} parent=35 // pred_check
          %p361 = pneg %p53
        $region38: #{tpu_custom_call.1} parent=35 // pred_check_branch
          %363 = sbr.rel (%p361) target = $region40
        $region39: #{tpu_custom_call.1} parent=35 // pred_region
          %s364 = sand.u32 %s43, 1
          %s365 = scalar_lea.sflag [#allocation3], %s364
          %s366 = sand.u32 %s43, 1
          %s367 = smul.addr %s366, 104
          %s368 = scalar_lea.vmem [#allocation2], %s367
          %s369 = smul.u32 13, %s33
          %371 = vsyncadd %s365, 0
          %s372 = smul.addr %s369, 8
          %s373 = scalar_lea.hbm %s0, %s372
          %s374 = sshll.u32 %s373, 4
          %s375 = int_to_ptr.hbm [resolvable:$true] %s374
          %s376 = sshll.u32 %s368, 4
          %s377 = int_to_ptr.vmem [resolvable:$true] %s376
          %382 = dma.hbm_to_vmem [thread:$0]  %s375, 1664, %s377, %s365, 128, 128, 8
        $region40: #{tpu_custom_call.1} parent=35 // pred_fallthru
          _
        // Predicated region
        $region41: #{tpu_custom_call.1} parent=35 // pred_check
          %p383 = pneg %p79
        $region42: #{tpu_custom_call.1} parent=35 // pred_check_branch
          %385 = sbr.rel (%p383) target = $region44
        $region43: #{tpu_custom_call.1} parent=35 // pred_region
          %s386 = sand.u32 %s33, 1
          %s387 = scalar_lea.sflag [#allocation6], %s386
          %s388 = sand.u32 %s69, 1
          %s389 = smul.addr %s388, 104
          %s390 = scalar_lea.vmem [#allocation5], %s389
          %s391 = smul.u32 13, %s33
          %393 = vsyncadd %s387, 0
          %s394 = smul.addr %s391, 8
          %s395 = scalar_lea.hbm %s1, %s394
          %s396 = sshll.u32 %s395, 4
          %s397 = int_to_ptr.hbm [resolvable:$true] %s396
          %s398 = sshll.u32 %s390, 4
          %s399 = int_to_ptr.vmem [resolvable:$true] %s398
          %404 = dma.hbm_to_vmem [thread:$0]  %s397, 1664, %s399, %s387, 128, 128, 8
        $region44: #{tpu_custom_call.1} parent=35 // pred_fallthru
          _
      $region36: #{tpu_custom_call.1} parent=5 // pred_fallthru
        _
      %p405 = scmp.le.s32.totalorder 1, %s33
      %p406 = scmp.lt.s32.totalorder %s33, 3
      %p407 = pnand %p405, %p406
      %p408 = pneg %p407
      // Predicated region
      $region45: #{tpu_custom_call.1} parent=5 // pred_check
        _
      $region46: #{tpu_custom_call.1} parent=5 // pred_check_branch
        %410 = sbr.rel (%p407) target = $region48
      $region47: #{tpu_custom_call.1} parent=5 // pred_region
        %s411 = ssub.s32 %s33, 1
        %s412 = sand.u32 %s46, 1
        %s413 = scalar_lea.sflag [#allocation3], %s412
        %s414 = sand.u32 %s46, 1
        %s415 = smul.addr %s414, 104
        %s416 = scalar_lea.vmem [#allocation2], %s415
        // Predicated region
        $region49: #{tpu_custom_call.1} parent=47 // pred_check
          %p417 = pneg %p59
        $region50: #{tpu_custom_call.1} parent=47 // pred_check_branch
          %419 = sbr.rel (%p417) target = $region52
        $region51: #{tpu_custom_call.1} parent=47 // pred_region
          %421 = dma.done %s413, 1664
        $region52: #{tpu_custom_call.1} parent=47 // pred_fallthru
          _
        %s422 = sand.u32 %s38, 1
        %s423 = scalar_lea.sflag [#allocation6], %s422
        %s424 = sand.u32 %s72, 1
        %s425 = smul.addr %s424, 104
        %s426 = scalar_lea.vmem [#allocation5], %s425
        // Predicated region
        $region53: #{tpu_custom_call.1} parent=47 // pred_check
          %p427 = pneg %p85
        $region54: #{tpu_custom_call.1} parent=47 // pred_check_branch
          %429 = sbr.rel (%p427) target = $region56
        $region55: #{tpu_custom_call.1} parent=47 // pred_region
          %431 = dma.done %s423, 1664
        $region56: #{tpu_custom_call.1} parent=47 // pred_fallthru
          _
        // Predicated region
        $region57: #{tpu_custom_call.1} parent=47 // pred_check
          %p432 = pneg %p106
        $region58: #{tpu_custom_call.1} parent=47 // pred_check_branch
          %434 = sbr.rel (%p432) target = $region60
        $region59: #{tpu_custom_call.1} parent=47 // pred_region
          %436 = dma.done [#allocation6], 4096
        $region60: #{tpu_custom_call.1} parent=47 // pred_fallthru
          _
        // Predicated region
        $region61: #{tpu_custom_call.1} parent=47 // pred_check
          %p437 = pneg %p127
        $region62: #{tpu_custom_call.1} parent=47 // pred_check_branch
          %439 = sbr.rel (%p437) target = $region64
        $region63: #{tpu_custom_call.1} parent=47 // pred_region
          %441 = dma.done [#allocation9], 4096
        $region64: #{tpu_custom_call.1} parent=47 // pred_fallthru
          _
        // Predicated region
        $region65: #{tpu_custom_call.1} parent=47 // pred_check
          %p442 = pneg %p169
        $region66: #{tpu_custom_call.1} parent=47 // pred_check_branch
          %444 = sbr.rel (%p442) target = $region68
        $region67: #{tpu_custom_call.1} parent=47 // pred_region
          %446 = dma.done [#allocation9], 4096
        $region68: #{tpu_custom_call.1} parent=47 // pred_fallthru
          _
        %s447 = sand.u32 %s46, 1
        %s448 = scalar_lea.sflag [#allocation3], %s447
        %s449 = sand.u32 %s46, 1
        %s450 = smul.addr %s449, 104
        %s451 = scalar_lea.vmem [#allocation2], %s450
        %p452 = pneg %p59
        %p453 = pneg %p56
        %s454 = sand.u32 %s38, 1
        %s455 = scalar_lea.sflag [#allocation6], %s454
        %s456 = sand.u32 %s72, 1
        %s457 = smul.addr %s456, 104
        %s458 = scalar_lea.vmem [#allocation5], %s457
        %p459 = pneg %p85
        %p460 = pneg %p82
        %p461 = pneg %p106
        %p462 = pneg %p103
        %p463 = pneg %p127
        %p464 = pneg %p124
        %p465 = pneg %p148
        %p466 = pneg %p145
        %p467 = pneg %p169
        %p468 = pneg %p166
        %p469 = pneg %p190
        %p470 = pneg %p187
        %p471 = pneg %p216
        %p472 = pneg %p213
        %s473 = sand.u32 %s203, 1
        %s474 = scalar_lea.sflag [#allocation4], %s473
        %s475 = sand.u32 %s203, 1
        %s476 = smul.addr %s475, 104
        %s477 = scalar_lea.vmem [#allocation11], %s476
        %p478 = pneg %p242
        %p479 = pneg %p239
        %s480 = sand.u32 %s38, 1
        %s481 = scalar_lea.sflag [#allocation13], %s480
        %s482 = sand.u32 %s229, 1
        %s483 = smul.addr %s482, 104
        %s484 = scalar_lea.vmem [#allocation12], %s483
        %p485 = pneg %p268
        %p486 = pneg %p265
        %s487 = sand.u32 %s38, 1
        %s488 = scalar_lea.sflag [#allocation13], %s487
        %s489 = sand.u32 %s255, 1
        %s490 = smul.addr %s489, 104
        %s491 = scalar_lea.vmem [#allocation14], %s490
        %p492 = pneg %p294
        %p493 = pneg %p291
        %s494 = sand.u32 %s281, 1
        %s495 = scalar_lea.sflag [#allocation16], %s494
        %s496 = sand.u32 %s281, 1
        %s497 = smul.addr %s496, 104
        %s498 = scalar_lea.vmem [#allocation15], %s497
        %s499 = smul.u32 13, %s38
        %s500 = smul.u32 13, %s38
        %s501 = smul.u32 13, %s38
        %s502 = smul.u32 13, %s38
        %s503 = smul.u32 13, %s38
        %s504 = smul.u32 13, %s38
        %v505 = vld [vmem:[%s416] sm:$0xff]
        %v506 = vld [vmem:[%s416 + $0x8] sm:$0xff]
        %v507 = vld [vmem:[%s416 + $0x10] sm:$0xff]
        %v508 = vld [vmem:[%s416 + $0x18] sm:$0xff]
        %v509 = vld [vmem:[%s416 + $0x20] sm:$0xff]
        %v510 = vld [vmem:[%s416 + $0x28] sm:$0xff]
        %v511 = vld [vmem:[%s416 + $0x30] sm:$0xff]
        %v512 = vld [vmem:[%s416 + $0x38] sm:$0xff]
        %v513 = vld [vmem:[%s416 + $0x40] sm:$0xff]
        %v514 = vld [vmem:[%s416 + $0x48] sm:$0xff]
        %v515 = vld [vmem:[%s416 + $0x50] sm:$0xff]
        %v516 = vld [vmem:[%s416 + $0x58] sm:$0xff]
        %v517 = vld [vmem:[%s416 + $0x60] sm:$0xff]
        %v518 = vld [vmem:[%s426] sm:$0xff]
        %v519 = vld [vmem:[%s426 + $0x8] sm:$0xff]
        %v520 = vld [vmem:[%s426 + $0x10] sm:$0xff]
        %v521 = vld [vmem:[%s426 + $0x18] sm:$0xff]
        %v522 = vld [vmem:[%s426 + $0x20] sm:$0xff]
        %v523 = vld [vmem:[%s426 + $0x28] sm:$0xff]
        %v524 = vld [vmem:[%s426 + $0x30] sm:$0xff]
        %v525 = vld [vmem:[%s426 + $0x38] sm:$0xff]
        %v526 = vld [vmem:[%s426 + $0x40] sm:$0xff]
        %v527 = vld [vmem:[%s426 + $0x48] sm:$0xff]
        %v528 = vld [vmem:[%s426 + $0x50] sm:$0xff]
        %v529 = vld [vmem:[%s426 + $0x58] sm:$0xff]
        %v530 = vld [vmem:[%s426 + $0x60] sm:$0xff]
        %v531 = vld [vmem:[#allocation7] sm:$0xff]
        %v532 = vld [vmem:[#allocation7 + $0x8] sm:$0xff]
        %v533 = vld [vmem:[#allocation7 + $0x10] sm:$0xff]
        %v534 = vld [vmem:[#allocation7 + $0x18] sm:$0xff]
        %v535 = vld [vmem:[#allocation7 + $0x20] sm:$0xff]
        %v536 = vld [vmem:[#allocation7 + $0x28] sm:$0xff]
        %v537 = vld [vmem:[#allocation7 + $0x30] sm:$0xff]
        %v538 = vld [vmem:[#allocation7 + $0x38] sm:$0xff]
        %v539 = vld [vmem:[#allocation7 + $0x40] sm:$0xff]
        %v540 = vld [vmem:[#allocation7 + $0x48] sm:$0xff]
        %v541 = vld [vmem:[#allocation7 + $0x50] sm:$0xff]
        %v542 = vld [vmem:[#allocation7 + $0x58] sm:$0xff]
        %v543 = vld [vmem:[#allocation7 + $0x60] sm:$0xff]
        %v544 = vld [vmem:[#allocation7 + $0x68] sm:$0xff]
        %v545 = vld [vmem:[#allocation7 + $0x70] sm:$0xff]
        %v546 = vld [vmem:[#allocation7 + $0x78] sm:$0xff]
        %v547 = vld [vmem:[#allocation7 + $0x80] sm:$0xff]
        %v548 = vld [vmem:[#allocation7 + $0x88] sm:$0xff]
        %v549 = vld [vmem:[#allocation7 + $0x90] sm:$0xff]
        %v550 = vld [vmem:[#allocation7 + $0x98] sm:$0xff]
        %v551 = vld [vmem:[#allocation7 + $0xa0] sm:$0xff]
        %v552 = vld [vmem:[#allocation7 + $0xa8] sm:$0xff]
        %v553 = vld [vmem:[#allocation7 + $0xb0] sm:$0xff]
        %v554 = vld [vmem:[#allocation7 + $0xb8] sm:$0xff]
        %v555 = vld [vmem:[#allocation7 + $0xc0] sm:$0xff]
        %v556 = vld [vmem:[#allocation7 + $0xc8] sm:$0xff]
        %v557 = vld [vmem:[#allocation7 + $0xd0] sm:$0xff]
        %v558 = vld [vmem:[#allocation7 + $0xd8] sm:$0xff]
        %v559 = vld [vmem:[#allocation7 + $0xe0] sm:$0xff]
        %v560 = vld [vmem:[#allocation7 + $0xe8] sm:$0xff]
        %v561 = vld [vmem:[#allocation7 + $0xf0] sm:$0xff]
        %v562 = vld [vmem:[#allocation7 + $0xf8] sm:$0xff]
        %v563 = vld [vmem:[#allocation8] sm:$0xff]
        %v564 = vld [vmem:[#allocation8 + $0x8] sm:$0xff]
        %v565 = vld [vmem:[#allocation8 + $0x10] sm:$0xff]
        %v566 = vld [vmem:[#allocation8 + $0x18] sm:$0xff]
        %v567 = vld [vmem:[#allocation8 + $0x20] sm:$0xff]
        %v568 = vld [vmem:[#allocation8 + $0x28] sm:$0xff]
        %v569 = vld [vmem:[#allocation8 + $0x30] sm:$0xff]
        %v570 = vld [vmem:[#allocation8 + $0x38] sm:$0xff]
        %v571 = vld [vmem:[#allocation8 + $0x40] sm:$0xff]
        %v572 = vld [vmem:[#allocation8 + $0x48] sm:$0xff]
        %v573 = vld [vmem:[#allocation8 + $0x50] sm:$0xff]
        %v574 = vld [vmem:[#allocation8 + $0x58] sm:$0xff]
        %v575 = vld [vmem:[#allocation8 + $0x60] sm:$0xff]
        %v576 = vld [vmem:[#allocation8 + $0x68] sm:$0xff]
        %v577 = vld [vmem:[#allocation8 + $0x70] sm:$0xff]
        %v578 = vld [vmem:[#allocation8 + $0x78] sm:$0xff]
        %v579 = vld [vmem:[#allocation8 + $0x80] sm:$0xff]
        %v580 = vld [vmem:[#allocation8 + $0x88] sm:$0xff]
        %v581 = vld [vmem:[#allocation8 + $0x90] sm:$0xff]
        %v582 = vld [vmem:[#allocation8 + $0x98] sm:$0xff]
        %v583 = vld [vmem:[#allocation8 + $0xa0] sm:$0xff]
        %v584 = vld [vmem:[#allocation8 + $0xa8] sm:$0xff]
        %v585 = vld [vmem:[#allocation8 + $0xb0] sm:$0xff]
        %v586 = vld [vmem:[#allocation8 + $0xb8] sm:$0xff]
        %v587 = vld [vmem:[#allocation8 + $0xc0] sm:$0xff]
        %v588 = vld [vmem:[#allocation8 + $0xc8] sm:$0xff]
        %v589 = vld [vmem:[#allocation8 + $0xd0] sm:$0xff]
        %v590 = vld [vmem:[#allocation8 + $0xd8] sm:$0xff]
        %v591 = vld [vmem:[#allocation8 + $0xe0] sm:$0xff]
        %v592 = vld [vmem:[#allocation8 + $0xe8] sm:$0xff]
        %v593 = vld [vmem:[#allocation8 + $0xf0] sm:$0xff]
        %v594 = vld [vmem:[#allocation8 + $0xf8] sm:$0xff]
        %595 = vmatpush.msra.mxu0 %v593
        %596 = vmatpush.msra.mxu0 %v591
        %597 = vmatpush.msra.mxu0 %v589
        %598 = vmatpush.msra.mxu0 %v587
        %599 = vmatpush.msra.mxu0 %v585
        %600 = vmatpush.msra.mxu0 %v583
        %601 = vmatpush.msra.mxu0 %v581
        %602 = vmatpush.msra.mxu0 %v579
        %603 = vmatpush.msra.mxu0 %v577
        %604 = vmatpush.msra.mxu0 %v575
        %605 = vmatpush.msra.mxu0 %v573
        %606 = vmatpush.msra.mxu0 %v571
        %607 = vmatpush.msra.mxu0 %v569
        %608 = vmatpush.msra.mxu0 %v567
        %609 = vmatpush.msra.mxu0 %v565
        %610 = vmatpush.msra.mxu0 %v563
        %611 = vmatmul.f32.gmra.mxu0 %v518
        %v612 = vpop.f32.mrf.mxu0
        %v613 = vadd.f32 0.0, %v612
        %614 = vmatmul.f32.gmra.mxu0 %v519
        %v615 = vpop.f32.mrf.mxu0
        %v616 = vadd.f32 0.0, %v615
        %617 = vmatmul.f32.gmra.mxu0 %v520
        %v618 = vpop.f32.mrf.mxu0
        %v619 = vadd.f32 0.0, %v618
        %620 = vmatmul.f32.gmra.mxu0 %v521
        %v621 = vpop.f32.mrf.mxu0
        %v622 = vadd.f32 0.0, %v621
        %623 = vmatmul.f32.gmra.mxu0 %v522
        %v624 = vpop.f32.mrf.mxu0
        %v625 = vadd.f32 0.0, %v624
        %626 = vmatmul.f32.gmra.mxu0 %v523
        %v627 = vpop.f32.mrf.mxu0
        %v628 = vadd.f32 0.0, %v627
        %629 = vmatmul.f32.gmra.mxu0 %v524
        %v630 = vpop.f32.mrf.mxu0
        %v631 = vadd.f32 0.0, %v630
        %632 = vmatmul.f32.gmra.mxu0 %v525
        %v633 = vpop.f32.mrf.mxu0
        %v634 = vadd.f32 0.0, %v633
        %635 = vmatmul.f32.gmra.mxu0 %v526
        %v636 = vpop.f32.mrf.mxu0
        %v637 = vadd.f32 0.0, %v636
        %638 = vmatmul.f32.gmra.mxu0 %v527
        %v639 = vpop.f32.mrf.mxu0
        %v640 = vadd.f32 0.0, %v639
        %641 = vmatmul.f32.gmra.mxu0 %v528
        %v642 = vpop.f32.mrf.mxu0
        %v643 = vadd.f32 0.0, %v642
        %644 = vmatmul.f32.gmra.mxu0 %v529
        %v645 = vpop.f32.mrf.mxu0
        %v646 = vadd.f32 0.0, %v645
        %647 = vmatmul.f32.gmra.mxu0 %v530
        %v648 = vpop.f32.mrf.mxu0
        %v649 = vadd.f32 0.0, %v648
        %650 = vdwg.mxu0
        %651 = vmatpush.msra.mxu0 %v594
        %652 = vmatpush.msra.mxu0 %v592
        %653 = vmatpush.msra.mxu0 %v590
        %654 = vmatpush.msra.mxu0 %v588
        %655 = vmatpush.msra.mxu0 %v586
        %656 = vmatpush.msra.mxu0 %v584
        %657 = vmatpush.msra.mxu0 %v582
        %658 = vmatpush.msra.mxu0 %v580
        %659 = vmatpush.msra.mxu0 %v578
        %660 = vmatpush.msra.mxu0 %v576
        %661 = vmatpush.msra.mxu0 %v574
        %662 = vmatpush.msra.mxu0 %v572
        %663 = vmatpush.msra.mxu0 %v570
        %664 = vmatpush.msra.mxu0 %v568
        %665 = vmatpush.msra.mxu0 %v566
        %666 = vmatpush.msra.mxu0 %v564
        %667 = vmatmul.f32.gmra.mxu0 %v518
        %v668 = vpop.f32.mrf.mxu0
        %v669 = vadd.f32 0.0, %v668
        %670 = vmatmul.f32.gmra.mxu0 %v519
        %v671 = vpop.f32.mrf.mxu0
        %v672 = vadd.f32 0.0, %v671
        %673 = vmatmul.f32.gmra.mxu0 %v520
        %v674 = vpop.f32.mrf.mxu0
        %v675 = vadd.f32 0.0, %v674
        %676 = vmatmul.f32.gmra.mxu0 %v521
        %v677 = vpop.f32.mrf.mxu0
        %v678 = vadd.f32 0.0, %v677
        %679 = vmatmul.f32.gmra.mxu0 %v522
        %v680 = vpop.f32.mrf.mxu0
        %v681 = vadd.f32 0.0, %v680
        %682 = vmatmul.f32.gmra.mxu0 %v523
        %v683 = vpop.f32.mrf.mxu0
        %v684 = vadd.f32 0.0, %v683
        %685 = vmatmul.f32.gmra.mxu0 %v524
        %v686 = vpop.f32.mrf.mxu0
        %v687 = vadd.f32 0.0, %v686
        %688 = vmatmul.f32.gmra.mxu0 %v525
        %v689 = vpop.f32.mrf.mxu0
        %v690 = vadd.f32 0.0, %v689
        %691 = vmatmul.f32.gmra.mxu0 %v526
        %v692 = vpop.f32.mrf.mxu0
        %v693 = vadd.f32 0.0, %v692
        %694 = vmatmul.f32.gmra.mxu0 %v527
        %v695 = vpop.f32.mrf.mxu0
        %v696 = vadd.f32 0.0, %v695
        %697 = vmatmul.f32.gmra.mxu0 %v528
        %v698 = vpop.f32.mrf.mxu0
        %v699 = vadd.f32 0.0, %v698
        %700 = vmatmul.f32.gmra.mxu0 %v529
        %v701 = vpop.f32.mrf.mxu0
        %v702 = vadd.f32 0.0, %v701
        %703 = vmatmul.f32.gmra.mxu0 %v530
        %v704 = vpop.f32.mrf.mxu0
        %v705 = vadd.f32 0.0, %v704
        %706 = vdwg.mxu0
        %707 = vmatpush.msra.mxu0 %v561
        %708 = vmatpush.msra.mxu0 %v559
        %709 = vmatpush.msra.mxu0 %v557
        %710 = vmatpush.msra.mxu0 %v555
        %711 = vmatpush.msra.mxu0 %v553
        %712 = vmatpush.msra.mxu0 %v551
        %713 = vmatpush.msra.mxu0 %v549
        %714 = vmatpush.msra.mxu0 %v547
        %715 = vmatpush.msra.mxu0 %v545
        %716 = vmatpush.msra.mxu0 %v543
        %717 = vmatpush.msra.mxu0 %v541
        %718 = vmatpush.msra.mxu0 %v539
        %719 = vmatpush.msra.mxu0 %v537
        %720 = vmatpush.msra.mxu0 %v535
        %721 = vmatpush.msra.mxu0 %v533
        %722 = vmatpush.msra.mxu0 %v531
        %723 = vmatmul.f32.gmra.mxu0 %v505
        %v724 = vpop.f32.mrf.mxu0
        %v725 = vadd.f32 %v613, %v724
        %726 = vmatmul.f32.gmra.mxu0 %v506
        %v727 = vpop.f32.mrf.mxu0
        %v728 = vadd.f32 %v616, %v727
        %729 = vmatmul.f32.gmra.mxu0 %v507
        %v730 = vpop.f32.mrf.mxu0
        %v731 = vadd.f32 %v619, %v730
        %732 = vmatmul.f32.gmra.mxu0 %v508
        %v733 = vpop.f32.mrf.mxu0
        %v734 = vadd.f32 %v622, %v733
        %735 = vmatmul.f32.gmra.mxu0 %v509
        %v736 = vpop.f32.mrf.mxu0
        %v737 = vadd.f32 %v625, %v736
        %738 = vmatmul.f32.gmra.mxu0 %v510
        %v739 = vpop.f32.mrf.mxu0
        %v740 = vadd.f32 %v628, %v739
        %741 = vmatmul.f32.gmra.mxu0 %v511
        %v742 = vpop.f32.mrf.mxu0
        %v743 = vadd.f32 %v631, %v742
        %744 = vmatmul.f32.gmra.mxu0 %v512
        %v745 = vpop.f32.mrf.mxu0
        %v746 = vadd.f32 %v634, %v745
        %747 = vmatmul.f32.gmra.mxu0 %v513
        %v748 = vpop.f32.mrf.mxu0
        %v749 = vadd.f32 %v637, %v748
        %750 = vmatmul.f32.gmra.mxu0 %v514
        %v751 = vpop.f32.mrf.mxu0
        %v752 = vadd.f32 %v640, %v751
        %753 = vmatmul.f32.gmra.mxu0 %v515
        %v754 = vpop.f32.mrf.mxu0
        %v755 = vadd.f32 %v643, %v754
        %756 = vmatmul.f32.gmra.mxu0 %v516
        %v757 = vpop.f32.mrf.mxu0
        %v758 = vadd.f32 %v646, %v757
        %759 = vmatmul.f32.gmra.mxu0 %v517
        %v760 = vpop.f32.mrf.mxu0
        %v761 = vadd.f32 %v649, %v760
        %762 = vdwg.mxu0
        %763 = vmatpush.msra.mxu0 %v562
        %764 = vmatpush.msra.mxu0 %v560
        %765 = vmatpush.msra.mxu0 %v558
        %766 = vmatpush.msra.mxu0 %v556
        %767 = vmatpush.msra.mxu0 %v554
        %768 = vmatpush.msra.mxu0 %v552
        %769 = vmatpush.msra.mxu0 %v550
        %770 = vmatpush.msra.mxu0 %v548
        %771 = vmatpush.msra.mxu0 %v546
        %772 = vmatpush.msra.mxu0 %v544
        %773 = vmatpush.msra.mxu0 %v542
        %774 = vmatpush.msra.mxu0 %v540
        %775 = vmatpush.msra.mxu0 %v538
        %776 = vmatpush.msra.mxu0 %v536
        %777 = vmatpush.msra.mxu0 %v534
        %778 = vmatpush.msra.mxu0 %v532
        %779 = vmatmul.f32.gmra.mxu0 %v505
        %v780 = vpop.f32.mrf.mxu0
        %v781 = vadd.f32 %v669, %v780
        %782 = vmatmul.f32.gmra.mxu0 %v506
        %v783 = vpop.f32.mrf.mxu0
        %v784 = vadd.f32 %v672, %v783
        %785 = vmatmul.f32.gmra.mxu0 %v507
        %v786 = vpop.f32.mrf.mxu0
        %v787 = vadd.f32 %v675, %v786
        %788 = vmatmul.f32.gmra.mxu0 %v508
        %v789 = vpop.f32.mrf.mxu0
        %v790 = vadd.f32 %v678, %v789
        %791 = vmatmul.f32.gmra.mxu0 %v509
        %v792 = vpop.f32.mrf.mxu0
        %v793 = vadd.f32 %v681, %v792
        %794 = vmatmul.f32.gmra.mxu0 %v510
        %v795 = vpop.f32.mrf.mxu0
        %v796 = vadd.f32 %v684, %v795
        %797 = vmatmul.f32.gmra.mxu0 %v511
        %v798 = vpop.f32.mrf.mxu0
        %v799 = vadd.f32 %v687, %v798
        %800 = vmatmul.f32.gmra.mxu0 %v512
        %v801 = vpop.f32.mrf.mxu0
        %v802 = vadd.f32 %v690, %v801
        %803 = vmatmul.f32.gmra.mxu0 %v513
        %v804 = vpop.f32.mrf.mxu0
        %v805 = vadd.f32 %v693, %v804
        %806 = vmatmul.f32.gmra.mxu0 %v514
        %v807 = vpop.f32.mrf.mxu0
        %v808 = vadd.f32 %v696, %v807
        %809 = vmatmul.f32.gmra.mxu0 %v515
        %v810 = vpop.f32.mrf.mxu0
        %v811 = vadd.f32 %v699, %v810
        %812 = vmatmul.f32.gmra.mxu0 %v516
        %v813 = vpop.f32.mrf.mxu0
        %v814 = vadd.f32 %v702, %v813
        %815 = vmatmul.f32.gmra.mxu0 %v517
        %v816 = vpop.f32.mrf.mxu0
        %v817 = vadd.f32 %v705, %v816
        %818 = vdwg.mxu0
        %v819 = vld [vmem:[%s4] sm:$0x3]
        %v821 = vperm.slane %v819, 0
        %v822 = vperm.slane %v819, 1
        %v825 = vadd.f32 %v725, %v821
        %v826 = vadd.f32 %v781, %v822
        %v827 = vadd.f32 %v728, %v821
        %v828 = vadd.f32 %v784, %v822
        %v829 = vadd.f32 %v731, %v821
        %v830 = vadd.f32 %v787, %v822
        %v831 = vadd.f32 %v734, %v821
        %v832 = vadd.f32 %v790, %v822
        %v833 = vadd.f32 %v737, %v821
        %v834 = vadd.f32 %v793, %v822
        %v835 = vadd.f32 %v740, %v821
        %v836 = vadd.f32 %v796, %v822
        %v837 = vadd.f32 %v743, %v821
        %v838 = vadd.f32 %v799, %v822
        %v839 = vadd.f32 %v746, %v821
        %v840 = vadd.f32 %v802, %v822
        %v841 = vadd.f32 %v749, %v821
        %v842 = vadd.f32 %v805, %v822
        %v843 = vadd.f32 %v752, %v821
        %v844 = vadd.f32 %v808, %v822
        %v845 = vadd.f32 %v755, %v821
        %v846 = vadd.f32 %v811, %v822
        %v847 = vadd.f32 %v758, %v821
        %v848 = vadd.f32 %v814, %v822
        %v849 = vadd.f32 %v761, %v821
        %v850 = vadd.f32 %v817, %v822
        %v851 = vld [vmem:[#allocation10] sm:$0xff]
        %v852 = vld [vmem:[#allocation10 + $0x8] sm:$0xff]
        %v853 = vld [vmem:[#allocation10 + $0x10] sm:$0xff]
        %v854 = vld [vmem:[#allocation10 + $0x18] sm:$0xff]
        %v855 = vld [vmem:[#allocation10 + $0x20] sm:$0xff]
        %v856 = vld [vmem:[#allocation10 + $0x28] sm:$0xff]
        %v857 = vld [vmem:[#allocation10 + $0x30] sm:$0xff]
        %v858 = vld [vmem:[#allocation10 + $0x38] sm:$0xff]
        %v859 = vld [vmem:[#allocation10 + $0x40] sm:$0xff]
        %v860 = vld [vmem:[#allocation10 + $0x48] sm:$0xff]
        %v861 = vld [vmem:[#allocation10 + $0x50] sm:$0xff]
        %v862 = vld [vmem:[#allocation10 + $0x58] sm:$0xff]
        %v863 = vld [vmem:[#allocation10 + $0x60] sm:$0xff]
        %v864 = vld [vmem:[#allocation10 + $0x68] sm:$0xff]
        %v865 = vld [vmem:[#allocation10 + $0x70] sm:$0xff]
        %v866 = vld [vmem:[#allocation10 + $0x78] sm:$0xff]
        %v867 = vld [vmem:[#allocation10 + $0x80] sm:$0xff]
        %v868 = vld [vmem:[#allocation10 + $0x88] sm:$0xff]
        %v869 = vld [vmem:[#allocation10 + $0x90] sm:$0xff]
        %v870 = vld [vmem:[#allocation10 + $0x98] sm:$0xff]
        %v871 = vld [vmem:[#allocation10 + $0xa0] sm:$0xff]
        %v872 = vld [vmem:[#allocation10 + $0xa8] sm:$0xff]
        %v873 = vld [vmem:[#allocation10 + $0xb0] sm:$0xff]
        %v874 = vld [vmem:[#allocation10 + $0xb8] sm:$0xff]
        %v875 = vld [vmem:[#allocation10 + $0xc0] sm:$0xff]
        %v876 = vld [vmem:[#allocation10 + $0xc8] sm:$0xff]
        %v877 = vld [vmem:[#allocation10 + $0xd0] sm:$0xff]
        %v878 = vld [vmem:[#allocation10 + $0xd8] sm:$0xff]
        %v879 = vld [vmem:[#allocation10 + $0xe0] sm:$0xff]
        %v880 = vld [vmem:[#allocation10 + $0xe8] sm:$0xff]
        %v881 = vld [vmem:[#allocation10 + $0xf0] sm:$0xff]
        %v882 = vld [vmem:[#allocation10 + $0xf8] sm:$0xff]
        %v883 = vld [vmem:[%s6] sm:$0x1]
        %v885 = vperm.slane %v883, 0
        %887 = vmatpush.msra.mxu0 %v866
        %888 = vmatpush.msra.mxu0 %v865
        %889 = vmatpush.msra.mxu0 %v864
        %890 = vmatpush.msra.mxu0 %v863
        %891 = vmatpush.msra.mxu0 %v862
        %892 = vmatpush.msra.mxu0 %v861
        %893 = vmatpush.msra.mxu0 %v860
        %894 = vmatpush.msra.mxu0 %v859
        %895 = vmatpush.msra.mxu0 %v858
        %896 = vmatpush.msra.mxu0 %v857
        %897 = vmatpush.msra.mxu0 %v856
        %898 = vmatpush.msra.mxu0 %v855
        %899 = vmatpush.msra.mxu0 %v854
        %900 = vmatpush.msra.mxu0 %v853
        %901 = vmatpush.msra.mxu0 %v852
        %902 = vmatpush.msra.mxu0 %v851
        %903 = vmatmul.f32.gmra.mxu0 %v825
        %v904 = vpop.f32.mrf.mxu0
        %v905 = vadd.f32 %v885, %v904
        %906 = vmatmul.f32.gmra.mxu0 %v827
        %v907 = vpop.f32.mrf.mxu0
        %v908 = vadd.f32 %v885, %v907
        %909 = vmatmul.f32.gmra.mxu0 %v829
        %v910 = vpop.f32.mrf.mxu0
        %v911 = vadd.f32 %v885, %v910
        %912 = vmatmul.f32.gmra.mxu0 %v831
        %v913 = vpop.f32.mrf.mxu0
        %v914 = vadd.f32 %v885, %v913
        %915 = vmatmul.f32.gmra.mxu0 %v833
        %v916 = vpop.f32.mrf.mxu0
        %v917 = vadd.f32 %v885, %v916
        %918 = vmatmul.f32.gmra.mxu0 %v835
        %v919 = vpop.f32.mrf.mxu0
        %v920 = vadd.f32 %v885, %v919
        %921 = vmatmul.f32.gmra.mxu0 %v837
        %v922 = vpop.f32.mrf.mxu0
        %v923 = vadd.f32 %v885, %v922
        %924 = vmatmul.f32.gmra.mxu0 %v839
        %v925 = vpop.f32.mrf.mxu0
        %v926 = vadd.f32 %v885, %v925
        %927 = vmatmul.f32.gmra.mxu0 %v841
        %v928 = vpop.f32.mrf.mxu0
        %v929 = vadd.f32 %v885, %v928
        %930 = vmatmul.f32.gmra.mxu0 %v843
        %v931 = vpop.f32.mrf.mxu0
        %v932 = vadd.f32 %v885, %v931
        %933 = vmatmul.f32.gmra.mxu0 %v845
        %v934 = vpop.f32.mrf.mxu0
        %v935 = vadd.f32 %v885, %v934
        %936 = vmatmul.f32.gmra.mxu0 %v847
        %v937 = vpop.f32.mrf.mxu0
        %v938 = vadd.f32 %v885, %v937
        %939 = vmatmul.f32.gmra.mxu0 %v849
        %v940 = vpop.f32.mrf.mxu0
        %v941 = vadd.f32 %v885, %v940
        %942 = vdwg.mxu0
        %943 = vmatpush.msra.mxu0 %v882
        %944 = vmatpush.msra.mxu0 %v881
        %945 = vmatpush.msra.mxu0 %v880
        %946 = vmatpush.msra.mxu0 %v879
        %947 = vmatpush.msra.mxu0 %v878
        %948 = vmatpush.msra.mxu0 %v877
        %949 = vmatpush.msra.mxu0 %v876
        %950 = vmatpush.msra.mxu0 %v875
        %951 = vmatpush.msra.mxu0 %v874
        %952 = vmatpush.msra.mxu0 %v873
        %953 = vmatpush.msra.mxu0 %v872
        %954 = vmatpush.msra.mxu0 %v871
        %955 = vmatpush.msra.mxu0 %v870
        %956 = vmatpush.msra.mxu0 %v869
        %957 = vmatpush.msra.mxu0 %v868
        %958 = vmatpush.msra.mxu0 %v867
        %959 = vmatmul.f32.gmra.mxu0 %v826
        %v960 = vpop.f32.mrf.mxu0
        %v961 = vadd.f32 %v905, %v960
        %962 = vmatmul.f32.gmra.mxu0 %v828
        %v963 = vpop.f32.mrf.mxu0
        %v964 = vadd.f32 %v908, %v963
        %965 = vmatmul.f32.gmra.mxu0 %v830
        %v966 = vpop.f32.mrf.mxu0
        %v967 = vadd.f32 %v911, %v966
        %968 = vmatmul.f32.gmra.mxu0 %v832
        %v969 = vpop.f32.mrf.mxu0
        %v970 = vadd.f32 %v914, %v969
        %971 = vmatmul.f32.gmra.mxu0 %v834
        %v972 = vpop.f32.mrf.mxu0
        %v973 = vadd.f32 %v917, %v972
        %974 = vmatmul.f32.gmra.mxu0 %v836
        %v975 = vpop.f32.mrf.mxu0
        %v976 = vadd.f32 %v920, %v975
        %977 = vmatmul.f32.gmra.mxu0 %v838
        %v978 = vpop.f32.mrf.mxu0
        %v979 = vadd.f32 %v923, %v978
        %980 = vmatmul.f32.gmra.mxu0 %v840
        %v981 = vpop.f32.mrf.mxu0
        %v982 = vadd.f32 %v926, %v981
        %983 = vmatmul.f32.gmra.mxu0 %v842
        %v984 = vpop.f32.mrf.mxu0
        %v985 = vadd.f32 %v929, %v984
        %986 = vmatmul.f32.gmra.mxu0 %v844
        %v987 = vpop.f32.mrf.mxu0
        %v988 = vadd.f32 %v932, %v987
        %989 = vmatmul.f32.gmra.mxu0 %v846
        %v990 = vpop.f32.mrf.mxu0
        %v991 = vadd.f32 %v935, %v990
        %992 = vmatmul.f32.gmra.mxu0 %v848
        %v993 = vpop.f32.mrf.mxu0
        %v994 = vadd.f32 %v938, %v993
        %995 = vmatmul.f32.gmra.mxu0 %v850
        %v996 = vpop.f32.mrf.mxu0
        %v997 = vadd.f32 %v941, %v996
        %998 = vdwg.mxu0
        %v999 = vmul.f32 %v961, %v505
        %v1000 = vmul.f32 %v964, %v506
        %v1001 = vmul.f32 %v967, %v507
        %v1002 = vmul.f32 %v970, %v508
        %v1003 = vmul.f32 %v973, %v509
        %v1004 = vmul.f32 %v976, %v510
        %v1005 = vmul.f32 %v979, %v511
        %v1006 = vmul.f32 %v982, %v512
        %v1007 = vmul.f32 %v985, %v513
        %v1008 = vmul.f32 %v988, %v514
        %v1009 = vmul.f32 %v991, %v515
        %v1010 = vmul.f32 %v994, %v516
        %v1011 = vmul.f32 %v997, %v517
        %v1012 = vxor.u32 %v999, 2147483648
        %v1013 = vxor.u32 %v1000, 2147483648
        %v1014 = vxor.u32 %v1001, 2147483648
        %v1015 = vxor.u32 %v1002, 2147483648
        %v1016 = vxor.u32 %v1003, 2147483648
        %v1017 = vxor.u32 %v1004, 2147483648
        %v1018 = vxor.u32 %v1005, 2147483648
        %v1019 = vxor.u32 %v1006, 2147483648
        %v1020 = vxor.u32 %v1007, 2147483648
        %v1021 = vxor.u32 %v1008, 2147483648
        %v1022 = vxor.u32 %v1009, 2147483648
        %v1023 = vxor.u32 %v1010, 2147483648
        %v1024 = vxor.u32 %v1011, 2147483648
        %v1025 = vmul.f32 %v1012, 1.442695
        %v1026 = vpow.pop %v1025
        %v1027 = vmul.f32 %v1013, 1.442695
        %v1028 = vpow.pop %v1027
        %v1029 = vmul.f32 %v1014, 1.442695
        %v1030 = vpow.pop %v1029
        %v1031 = vmul.f32 %v1015, 1.442695
        %v1032 = vpow.pop %v1031
        %v1033 = vmul.f32 %v1016, 1.442695
        %v1034 = vpow.pop %v1033
        %v1035 = vmul.f32 %v1017, 1.442695
        %v1036 = vpow.pop %v1035
        %v1037 = vmul.f32 %v1018, 1.442695
        %v1038 = vpow.pop %v1037
        %v1039 = vmul.f32 %v1019, 1.442695
        %v1040 = vpow.pop %v1039
        %v1041 = vmul.f32 %v1020, 1.442695
        %v1042 = vpow.pop %v1041
        %v1043 = vmul.f32 %v1021, 1.442695
        %v1044 = vpow.pop %v1043
        %v1045 = vmul.f32 %v1022, 1.442695
        %v1046 = vpow.pop %v1045
        %v1047 = vmul.f32 %v1023, 1.442695
        %v1048 = vpow.pop %v1047
        %v1049 = vmul.f32 %v1024, 1.442695
        %v1050 = vpow.pop %v1049
        %v1051 = vadd.f32 %v1026, 1.0
        %v1052 = vadd.f32 %v1028, 1.0
        %v1053 = vadd.f32 %v1030, 1.0
        %v1054 = vadd.f32 %v1032, 1.0
        %v1055 = vadd.f32 %v1034, 1.0
        %v1056 = vadd.f32 %v1036, 1.0
        %v1057 = vadd.f32 %v1038, 1.0
        %v1058 = vadd.f32 %v1040, 1.0
        %v1059 = vadd.f32 %v1042, 1.0
        %v1060 = vadd.f32 %v1044, 1.0
        %v1061 = vadd.f32 %v1046, 1.0
        %v1062 = vadd.f32 %v1048, 1.0
        %v1063 = vadd.f32 %v1050, 1.0
        %v1064 = vrcp.pop %v1051
        %v1065 = vmul.f32 %v1051, %v1064
        %v1066 = vsub.f32 1.0, %v1065
        %v1067 = vmul.f32 %v1064, %v1066
        %v1068 = vadd.f32 %v1064, %v1067
        %vm1069 = vweird.f32 %v1051
        %vm1070 = vweird.f32 %v1064
        %vm1071 = vmor %vm1069, %vm1070
        %v1072 = vsel %vm1071, %v1064, %v1068
        %v1073 = vand.u32 2147483647, %v1051
        %vm1074 = vcmp.eq.f32.partialorder %v1073, 8.507059e+37
        %v1075 = vand.u32 %v1051, 2147483648
        %v1076 = vor.u32 1.1754944e-38, %v1075
        %v1077 = vsel %vm1074, %v1076, %v1072
        %v1078 = vmul.f32 1.0, %v1077
        %v1079 = vrcp.pop %v1052
        %v1080 = vmul.f32 %v1052, %v1079
        %v1081 = vsub.f32 1.0, %v1080
        %v1082 = vmul.f32 %v1079, %v1081
        %v1083 = vadd.f32 %v1079, %v1082
        %vm1084 = vweird.f32 %v1052
        %vm1085 = vweird.f32 %v1079
        %vm1086 = vmor %vm1084, %vm1085
        %v1087 = vsel %vm1086, %v1079, %v1083
        %v1088 = vand.u32 2147483647, %v1052
        %vm1089 = vcmp.eq.f32.partialorder %v1088, 8.507059e+37
        %v1090 = vand.u32 %v1052, 2147483648
        %v1091 = vor.u32 1.1754944e-38, %v1090
        %v1092 = vsel %vm1089, %v1091, %v1087
        %v1093 = vmul.f32 1.0, %v1092
        %v1094 = vrcp.pop %v1053
        %v1095 = vmul.f32 %v1053, %v1094
        %v1096 = vsub.f32 1.0, %v1095
        %v1097 = vmul.f32 %v1094, %v1096
        %v1098 = vadd.f32 %v1094, %v1097
        %vm1099 = vweird.f32 %v1053
        %vm1100 = vweird.f32 %v1094
        %vm1101 = vmor %vm1099, %vm1100
        %v1102 = vsel %vm1101, %v1094, %v1098
        %v1103 = vand.u32 2147483647, %v1053
        %vm1104 = vcmp.eq.f32.partialorder %v1103, 8.507059e+37
        %v1105 = vand.u32 %v1053, 2147483648
        %v1106 = vor.u32 1.1754944e-38, %v1105
        %v1107 = vsel %vm1104, %v1106, %v1102
        %v1108 = vmul.f32 1.0, %v1107
        %v1109 = vrcp.pop %v1054
        %v1110 = vmul.f32 %v1054, %v1109
        %v1111 = vsub.f32 1.0, %v1110
        %v1112 = vmul.f32 %v1109, %v1111
        %v1113 = vadd.f32 %v1109, %v1112
        %vm1114 = vweird.f32 %v1054
        %vm1115 = vweird.f32 %v1109
        %vm1116 = vmor %vm1114, %vm1115
        %v1117 = vsel %vm1116, %v1109, %v1113
        %v1118 = vand.u32 2147483647, %v1054
        %vm1119 = vcmp.eq.f32.partialorder %v1118, 8.507059e+37
        %v1120 = vand.u32 %v1054, 2147483648
        %v1121 = vor.u32 1.1754944e-38, %v1120
        %v1122 = vsel %vm1119, %v1121, %v1117
        %v1123 = vmul.f32 1.0, %v1122
        %v1124 = vrcp.pop %v1055
        %v1125 = vmul.f32 %v1055, %v1124
        %v1126 = vsub.f32 1.0, %v1125
        %v1127 = vmul.f32 %v1124, %v1126
        %v1128 = vadd.f32 %v1124, %v1127
        %vm1129 = vweird.f32 %v1055
        %vm1130 = vweird.f32 %v1124
        %vm1131 = vmor %vm1129, %vm1130
        %v1132 = vsel %vm1131, %v1124, %v1128
        %v1133 = vand.u32 2147483647, %v1055
        %vm1134 = vcmp.eq.f32.partialorder %v1133, 8.507059e+37
        %v1135 = vand.u32 %v1055, 2147483648
        %v1136 = vor.u32 1.1754944e-38, %v1135
        %v1137 = vsel %vm1134, %v1136, %v1132
        %v1138 = vmul.f32 1.0, %v1137
        %v1139 = vrcp.pop %v1056
        %v1140 = vmul.f32 %v1056, %v1139
        %v1141 = vsub.f32 1.0, %v1140
        %v1142 = vmul.f32 %v1139, %v1141
        %v1143 = vadd.f32 %v1139, %v1142
        %vm1144 = vweird.f32 %v1056
        %vm1145 = vweird.f32 %v1139
        %vm1146 = vmor %vm1144, %vm1145
        %v1147 = vsel %vm1146, %v1139, %v1143
        %v1148 = vand.u32 2147483647, %v1056
        %vm1149 = vcmp.eq.f32.partialorder %v1148, 8.507059e+37
        %v1150 = vand.u32 %v1056, 2147483648
        %v1151 = vor.u32 1.1754944e-38, %v1150
        %v1152 = vsel %vm1149, %v1151, %v1147
        %v1153 = vmul.f32 1.0, %v1152
        %v1154 = vrcp.pop %v1057
        %v1155 = vmul.f32 %v1057, %v1154
        %v1156 = vsub.f32 1.0, %v1155
        %v1157 = vmul.f32 %v1154, %v1156
        %v1158 = vadd.f32 %v1154, %v1157
        %vm1159 = vweird.f32 %v1057
        %vm1160 = vweird.f32 %v1154
        %vm1161 = vmor %vm1159, %vm1160
        %v1162 = vsel %vm1161, %v1154, %v1158
        %v1163 = vand.u32 2147483647, %v1057
        %vm1164 = vcmp.eq.f32.partialorder %v1163, 8.507059e+37
        %v1165 = vand.u32 %v1057, 2147483648
        %v1166 = vor.u32 1.1754944e-38, %v1165
        %v1167 = vsel %vm1164, %v1166, %v1162
        %v1168 = vmul.f32 1.0, %v1167
        %v1169 = vrcp.pop %v1058
        %v1170 = vmul.f32 %v1058, %v1169
        %v1171 = vsub.f32 1.0, %v1170
        %v1172 = vmul.f32 %v1169, %v1171
        %v1173 = vadd.f32 %v1169, %v1172
        %vm1174 = vweird.f32 %v1058
        %vm1175 = vweird.f32 %v1169
        %vm1176 = vmor %vm1174, %vm1175
        %v1177 = vsel %vm1176, %v1169, %v1173
        %v1178 = vand.u32 2147483647, %v1058
        %vm1179 = vcmp.eq.f32.partialorder %v1178, 8.507059e+37
        %v1180 = vand.u32 %v1058, 2147483648
        %v1181 = vor.u32 1.1754944e-38, %v1180
        %v1182 = vsel %vm1179, %v1181, %v1177
        %v1183 = vmul.f32 1.0, %v1182
        %v1184 = vrcp.pop %v1059
        %v1185 = vmul.f32 %v1059, %v1184
        %v1186 = vsub.f32 1.0, %v1185
        %v1187 = vmul.f32 %v1184, %v1186
        %v1188 = vadd.f32 %v1184, %v1187
        %vm1189 = vweird.f32 %v1059
        %vm1190 = vweird.f32 %v1184
        %vm1191 = vmor %vm1189, %vm1190
        %v1192 = vsel %vm1191, %v1184, %v1188
        %v1193 = vand.u32 2147483647, %v1059
        %vm1194 = vcmp.eq.f32.partialorder %v1193, 8.507059e+37
        %v1195 = vand.u32 %v1059, 2147483648
        %v1196 = vor.u32 1.1754944e-38, %v1195
        %v1197 = vsel %vm1194, %v1196, %v1192
        %v1198 = vmul.f32 1.0, %v1197
        %v1199 = vrcp.pop %v1060
        %v1200 = vmul.f32 %v1060, %v1199
        %v1201 = vsub.f32 1.0, %v1200
        %v1202 = vmul.f32 %v1199, %v1201
        %v1203 = vadd.f32 %v1199, %v1202
        %vm1204 = vweird.f32 %v1060
        %vm1205 = vweird.f32 %v1199
        %vm1206 = vmor %vm1204, %vm1205
        %v1207 = vsel %vm1206, %v1199, %v1203
        %v1208 = vand.u32 2147483647, %v1060
        %vm1209 = vcmp.eq.f32.partialorder %v1208, 8.507059e+37
        %v1210 = vand.u32 %v1060, 2147483648
        %v1211 = vor.u32 1.1754944e-38, %v1210
        %v1212 = vsel %vm1209, %v1211, %v1207
        %v1213 = vmul.f32 1.0, %v1212
        %v1214 = vrcp.pop %v1061
        %v1215 = vmul.f32 %v1061, %v1214
        %v1216 = vsub.f32 1.0, %v1215
        %v1217 = vmul.f32 %v1214, %v1216
        %v1218 = vadd.f32 %v1214, %v1217
        %vm1219 = vweird.f32 %v1061
        %vm1220 = vweird.f32 %v1214
        %vm1221 = vmor %vm1219, %vm1220
        %v1222 = vsel %vm1221, %v1214, %v1218
        %v1223 = vand.u32 2147483647, %v1061
        %vm1224 = vcmp.eq.f32.partialorder %v1223, 8.507059e+37
        %v1225 = vand.u32 %v1061, 2147483648
        %v1226 = vor.u32 1.1754944e-38, %v1225
        %v1227 = vsel %vm1224, %v1226, %v1222
        %v1228 = vmul.f32 1.0, %v1227
        %v1229 = vrcp.pop %v1062
        %v1230 = vmul.f32 %v1062, %v1229
        %v1231 = vsub.f32 1.0, %v1230
        %v1232 = vmul.f32 %v1229, %v1231
        %v1233 = vadd.f32 %v1229, %v1232
        %vm1234 = vweird.f32 %v1062
        %vm1235 = vweird.f32 %v1229
        %vm1236 = vmor %vm1234, %vm1235
        %v1237 = vsel %vm1236, %v1229, %v1233
        %v1238 = vand.u32 2147483647, %v1062
        %vm1239 = vcmp.eq.f32.partialorder %v1238, 8.507059e+37
        %v1240 = vand.u32 %v1062, 2147483648
        %v1241 = vor.u32 1.1754944e-38, %v1240
        %v1242 = vsel %vm1239, %v1241, %v1237
        %v1243 = vmul.f32 1.0, %v1242
        %v1244 = vrcp.pop %v1063
        %v1245 = vmul.f32 %v1063, %v1244
        %v1246 = vsub.f32 1.0, %v1245
        %v1247 = vmul.f32 %v1244, %v1246
        %v1248 = vadd.f32 %v1244, %v1247
        %vm1249 = vweird.f32 %v1063
        %vm1250 = vweird.f32 %v1244
        %vm1251 = vmor %vm1249, %vm1250
        %v1252 = vsel %vm1251, %v1244, %v1248
        %v1253 = vand.u32 2147483647, %v1063
        %vm1254 = vcmp.eq.f32.partialorder %v1253, 8.507059e+37
        %v1255 = vand.u32 %v1063, 2147483648
        %v1256 = vor.u32 1.1754944e-38, %v1255
        %v1257 = vsel %vm1254, %v1256, %v1252
        %v1258 = vmul.f32 1.0, %v1257
        %v1259 = vadd.f32 %v1078, 1.0
        %v1260 = vadd.f32 %v1093, 1.0
        %v1261 = vadd.f32 %v1108, 1.0
        %v1262 = vadd.f32 %v1123, 1.0
        %v1263 = vadd.f32 %v1138, 1.0
        %v1264 = vadd.f32 %v1153, 1.0
        %v1265 = vadd.f32 %v1168, 1.0
        %v1266 = vadd.f32 %v1183, 1.0
        %v1267 = vadd.f32 %v1198, 1.0
        %v1268 = vadd.f32 %v1213, 1.0
        %v1269 = vadd.f32 %v1228, 1.0
        %v1270 = vadd.f32 %v1243, 1.0
        %v1271 = vadd.f32 %v1258, 1.0
        %v1272 = vmul.f32 %v961, %v518
        %v1273 = vmul.f32 %v964, %v519
        %v1274 = vmul.f32 %v967, %v520
        %v1275 = vmul.f32 %v970, %v521
        %v1276 = vmul.f32 %v973, %v522
        %v1277 = vmul.f32 %v976, %v523
        %v1278 = vmul.f32 %v979, %v524
        %v1279 = vmul.f32 %v982, %v525
        %v1280 = vmul.f32 %v985, %v526
        %v1281 = vmul.f32 %v988, %v527
        %v1282 = vmul.f32 %v991, %v528
        %v1283 = vmul.f32 %v994, %v529
        %v1284 = vmul.f32 %v997, %v530
        %v1285 = vxor.u32 %v1272, 2147483648
        %v1286 = vxor.u32 %v1273, 2147483648
        %v1287 = vxor.u32 %v1274, 2147483648
        %v1288 = vxor.u32 %v1275, 2147483648
        %v1289 = vxor.u32 %v1276, 2147483648
        %v1290 = vxor.u32 %v1277, 2147483648
        %v1291 = vxor.u32 %v1278, 2147483648
        %v1292 = vxor.u32 %v1279, 2147483648
        %v1293 = vxor.u32 %v1280, 2147483648
        %v1294 = vxor.u32 %v1281, 2147483648
        %v1295 = vxor.u32 %v1282, 2147483648
        %v1296 = vxor.u32 %v1283, 2147483648
        %v1297 = vxor.u32 %v1284, 2147483648
        %v1298 = vmul.f32 %v1285, 1.442695
        %v1299 = vpow.pop %v1298
        %v1300 = vmul.f32 %v1286, 1.442695
        %v1301 = vpow.pop %v1300
        %v1302 = vmul.f32 %v1287, 1.442695
        %v1303 = vpow.pop %v1302
        %v1304 = vmul.f32 %v1288, 1.442695
        %v1305 = vpow.pop %v1304
        %v1306 = vmul.f32 %v1289, 1.442695
        %v1307 = vpow.pop %v1306
        %v1308 = vmul.f32 %v1290, 1.442695
        %v1309 = vpow.pop %v1308
        %v1310 = vmul.f32 %v1291, 1.442695
        %v1311 = vpow.pop %v1310
        %v1312 = vmul.f32 %v1292, 1.442695
        %v1313 = vpow.pop %v1312
        %v1314 = vmul.f32 %v1293, 1.442695
        %v1315 = vpow.pop %v1314
        %v1316 = vmul.f32 %v1294, 1.442695
        %v1317 = vpow.pop %v1316
        %v1318 = vmul.f32 %v1295, 1.442695
        %v1319 = vpow.pop %v1318
        %v1320 = vmul.f32 %v1296, 1.442695
        %v1321 = vpow.pop %v1320
        %v1322 = vmul.f32 %v1297, 1.442695
        %v1323 = vpow.pop %v1322
        %v1324 = vadd.f32 %v1299, 1.0
        %v1325 = vadd.f32 %v1301, 1.0
        %v1326 = vadd.f32 %v1303, 1.0
        %v1327 = vadd.f32 %v1305, 1.0
        %v1328 = vadd.f32 %v1307, 1.0
        %v1329 = vadd.f32 %v1309, 1.0
        %v1330 = vadd.f32 %v1311, 1.0
        %v1331 = vadd.f32 %v1313, 1.0
        %v1332 = vadd.f32 %v1315, 1.0
        %v1333 = vadd.f32 %v1317, 1.0
        %v1334 = vadd.f32 %v1319, 1.0
        %v1335 = vadd.f32 %v1321, 1.0
        %v1336 = vadd.f32 %v1323, 1.0
        %v1337 = vrcp.pop %v1324
        %v1338 = vmul.f32 %v1324, %v1337
        %v1339 = vsub.f32 1.0, %v1338
        %v1340 = vmul.f32 %v1337, %v1339
        %v1341 = vadd.f32 %v1337, %v1340
        %vm1342 = vweird.f32 %v1324
        %vm1343 = vweird.f32 %v1337
        %vm1344 = vmor %vm1342, %vm1343
        %v1345 = vsel %vm1344, %v1337, %v1341
        %v1346 = vand.u32 2147483647, %v1324
        %vm1347 = vcmp.eq.f32.partialorder %v1346, 8.507059e+37
        %v1348 = vand.u32 %v1324, 2147483648
        %v1349 = vor.u32 1.1754944e-38, %v1348
        %v1350 = vsel %vm1347, %v1349, %v1345
        %v1351 = vmul.f32 1.0, %v1350
        %v1352 = vrcp.pop %v1325
        %v1353 = vmul.f32 %v1325, %v1352
        %v1354 = vsub.f32 1.0, %v1353
        %v1355 = vmul.f32 %v1352, %v1354
        %v1356 = vadd.f32 %v1352, %v1355
        %vm1357 = vweird.f32 %v1325
        %vm1358 = vweird.f32 %v1352
        %vm1359 = vmor %vm1357, %vm1358
        %v1360 = vsel %vm1359, %v1352, %v1356
        %v1361 = vand.u32 2147483647, %v1325
        %vm1362 = vcmp.eq.f32.partialorder %v1361, 8.507059e+37
        %v1363 = vand.u32 %v1325, 2147483648
        %v1364 = vor.u32 1.1754944e-38, %v1363
        %v1365 = vsel %vm1362, %v1364, %v1360
        %v1366 = vmul.f32 1.0, %v1365
        %v1367 = vrcp.pop %v1326
        %v1368 = vmul.f32 %v1326, %v1367
        %v1369 = vsub.f32 1.0, %v1368
        %v1370 = vmul.f32 %v1367, %v1369
        %v1371 = vadd.f32 %v1367, %v1370
        %vm1372 = vweird.f32 %v1326
        %vm1373 = vweird.f32 %v1367
        %vm1374 = vmor %vm1372, %vm1373
        %v1375 = vsel %vm1374, %v1367, %v1371
        %v1376 = vand.u32 2147483647, %v1326
        %vm1377 = vcmp.eq.f32.partialorder %v1376, 8.507059e+37
        %v1378 = vand.u32 %v1326, 2147483648
        %v1379 = vor.u32 1.1754944e-38, %v1378
        %v1380 = vsel %vm1377, %v1379, %v1375
        %v1381 = vmul.f32 1.0, %v1380
        %v1382 = vrcp.pop %v1327
        %v1383 = vmul.f32 %v1327, %v1382
        %v1384 = vsub.f32 1.0, %v1383
        %v1385 = vmul.f32 %v1382, %v1384
        %v1386 = vadd.f32 %v1382, %v1385
        %vm1387 = vweird.f32 %v1327
        %vm1388 = vweird.f32 %v1382
        %vm1389 = vmor %vm1387, %vm1388
        %v1390 = vsel %vm1389, %v1382, %v1386
        %v1391 = vand.u32 2147483647, %v1327
        %vm1392 = vcmp.eq.f32.partialorder %v1391, 8.507059e+37
        %v1393 = vand.u32 %v1327, 2147483648
        %v1394 = vor.u32 1.1754944e-38, %v1393
        %v1395 = vsel %vm1392, %v1394, %v1390
        %v1396 = vmul.f32 1.0, %v1395
        %v1397 = vrcp.pop %v1328
        %v1398 = vmul.f32 %v1328, %v1397
        %v1399 = vsub.f32 1.0, %v1398
        %v1400 = vmul.f32 %v1397, %v1399
        %v1401 = vadd.f32 %v1397, %v1400
        %vm1402 = vweird.f32 %v1328
        %vm1403 = vweird.f32 %v1397
        %vm1404 = vmor %vm1402, %vm1403
        %v1405 = vsel %vm1404, %v1397, %v1401
        %v1406 = vand.u32 2147483647, %v1328
        %vm1407 = vcmp.eq.f32.partialorder %v1406, 8.507059e+37
        %v1408 = vand.u32 %v1328, 2147483648
        %v1409 = vor.u32 1.1754944e-38, %v1408
        %v1410 = vsel %vm1407, %v1409, %v1405
        %v1411 = vmul.f32 1.0, %v1410
        %v1412 = vrcp.pop %v1329
        %v1413 = vmul.f32 %v1329, %v1412
        %v1414 = vsub.f32 1.0, %v1413
        %v1415 = vmul.f32 %v1412, %v1414
        %v1416 = vadd.f32 %v1412, %v1415
        %vm1417 = vweird.f32 %v1329
        %vm1418 = vweird.f32 %v1412
        %vm1419 = vmor %vm1417, %vm1418
        %v1420 = vsel %vm1419, %v1412, %v1416
        %v1421 = vand.u32 2147483647, %v1329
        %vm1422 = vcmp.eq.f32.partialorder %v1421, 8.507059e+37
        %v1423 = vand.u32 %v1329, 2147483648
        %v1424 = vor.u32 1.1754944e-38, %v1423
        %v1425 = vsel %vm1422, %v1424, %v1420
        %v1426 = vmul.f32 1.0, %v1425
        %v1427 = vrcp.pop %v1330
        %v1428 = vmul.f32 %v1330, %v1427
        %v1429 = vsub.f32 1.0, %v1428
        %v1430 = vmul.f32 %v1427, %v1429
        %v1431 = vadd.f32 %v1427, %v1430
        %vm1432 = vweird.f32 %v1330
        %vm1433 = vweird.f32 %v1427
        %vm1434 = vmor %vm1432, %vm1433
        %v1435 = vsel %vm1434, %v1427, %v1431
        %v1436 = vand.u32 2147483647, %v1330
        %vm1437 = vcmp.eq.f32.partialorder %v1436, 8.507059e+37
        %v1438 = vand.u32 %v1330, 2147483648
        %v1439 = vor.u32 1.1754944e-38, %v1438
        %v1440 = vsel %vm1437, %v1439, %v1435
        %v1441 = vmul.f32 1.0, %v1440
        %v1442 = vrcp.pop %v1331
        %v1443 = vmul.f32 %v1331, %v1442
        %v1444 = vsub.f32 1.0, %v1443
        %v1445 = vmul.f32 %v1442, %v1444
        %v1446 = vadd.f32 %v1442, %v1445
        %vm1447 = vweird.f32 %v1331
        %vm1448 = vweird.f32 %v1442
        %vm1449 = vmor %vm1447, %vm1448
        %v1450 = vsel %vm1449, %v1442, %v1446
        %v1451 = vand.u32 2147483647, %v1331
        %vm1452 = vcmp.eq.f32.partialorder %v1451, 8.507059e+37
        %v1453 = vand.u32 %v1331, 2147483648
        %v1454 = vor.u32 1.1754944e-38, %v1453
        %v1455 = vsel %vm1452, %v1454, %v1450
        %v1456 = vmul.f32 1.0, %v1455
        %v1457 = vrcp.pop %v1332
        %v1458 = vmul.f32 %v1332, %v1457
        %v1459 = vsub.f32 1.0, %v1458
        %v1460 = vmul.f32 %v1457, %v1459
        %v1461 = vadd.f32 %v1457, %v1460
        %vm1462 = vweird.f32 %v1332
        %vm1463 = vweird.f32 %v1457
        %vm1464 = vmor %vm1462, %vm1463
        %v1465 = vsel %vm1464, %v1457, %v1461
        %v1466 = vand.u32 2147483647, %v1332
        %vm1467 = vcmp.eq.f32.partialorder %v1466, 8.507059e+37
        %v1468 = vand.u32 %v1332, 2147483648
        %v1469 = vor.u32 1.1754944e-38, %v1468
        %v1470 = vsel %vm1467, %v1469, %v1465
        %v1471 = vmul.f32 1.0, %v1470
        %v1472 = vrcp.pop %v1333
        %v1473 = vmul.f32 %v1333, %v1472
        %v1474 = vsub.f32 1.0, %v1473
        %v1475 = vmul.f32 %v1472, %v1474
        %v1476 = vadd.f32 %v1472, %v1475
        %vm1477 = vweird.f32 %v1333
        %vm1478 = vweird.f32 %v1472
        %vm1479 = vmor %vm1477, %vm1478
        %v1480 = vsel %vm1479, %v1472, %v1476
        %v1481 = vand.u32 2147483647, %v1333
        %vm1482 = vcmp.eq.f32.partialorder %v1481, 8.507059e+37
        %v1483 = vand.u32 %v1333, 2147483648
        %v1484 = vor.u32 1.1754944e-38, %v1483
        %v1485 = vsel %vm1482, %v1484, %v1480
        %v1486 = vmul.f32 1.0, %v1485
        %v1487 = vrcp.pop %v1334
        %v1488 = vmul.f32 %v1334, %v1487
        %v1489 = vsub.f32 1.0, %v1488
        %v1490 = vmul.f32 %v1487, %v1489
        %v1491 = vadd.f32 %v1487, %v1490
        %vm1492 = vweird.f32 %v1334
        %vm1493 = vweird.f32 %v1487
        %vm1494 = vmor %vm1492, %vm1493
        %v1495 = vsel %vm1494, %v1487, %v1491
        %v1496 = vand.u32 2147483647, %v1334
        %vm1497 = vcmp.eq.f32.partialorder %v1496, 8.507059e+37
        %v1498 = vand.u32 %v1334, 2147483648
        %v1499 = vor.u32 1.1754944e-38, %v1498
        %v1500 = vsel %vm1497, %v1499, %v1495
        %v1501 = vmul.f32 1.0, %v1500
        %v1502 = vrcp.pop %v1335
        %v1503 = vmul.f32 %v1335, %v1502
        %v1504 = vsub.f32 1.0, %v1503
        %v1505 = vmul.f32 %v1502, %v1504
        %v1506 = vadd.f32 %v1502, %v1505
        %vm1507 = vweird.f32 %v1335
        %vm1508 = vweird.f32 %v1502
        %vm1509 = vmor %vm1507, %vm1508
        %v1510 = vsel %vm1509, %v1502, %v1506
        %v1511 = vand.u32 2147483647, %v1335
        %vm1512 = vcmp.eq.f32.partialorder %v1511, 8.507059e+37
        %v1513 = vand.u32 %v1335, 2147483648
        %v1514 = vor.u32 1.1754944e-38, %v1513
        %v1515 = vsel %vm1512, %v1514, %v1510
        %v1516 = vmul.f32 1.0, %v1515
        %v1517 = vrcp.pop %v1336
        %v1518 = vmul.f32 %v1336, %v1517
        %v1519 = vsub.f32 1.0, %v1518
        %v1520 = vmul.f32 %v1517, %v1519
        %v1521 = vadd.f32 %v1517, %v1520
        %vm1522 = vweird.f32 %v1336
        %vm1523 = vweird.f32 %v1517
        %vm1524 = vmor %vm1522, %vm1523
        %v1525 = vsel %vm1524, %v1517, %v1521
        %v1526 = vand.u32 2147483647, %v1336
        %vm1527 = vcmp.eq.f32.partialorder %v1526, 8.507059e+37
        %v1528 = vand.u32 %v1336, 2147483648
        %v1529 = vor.u32 1.1754944e-38, %v1528
        %v1530 = vsel %vm1527, %v1529, %v1525
        %v1531 = vmul.f32 1.0, %v1530
        %v1532 = vadd.f32 %v1351, 1.0
        %v1533 = vadd.f32 %v1366, 1.0
        %v1534 = vadd.f32 %v1381, 1.0
        %v1535 = vadd.f32 %v1396, 1.0
        %v1536 = vadd.f32 %v1411, 1.0
        %v1537 = vadd.f32 %v1426, 1.0
        %v1538 = vadd.f32 %v1441, 1.0
        %v1539 = vadd.f32 %v1456, 1.0
        %v1540 = vadd.f32 %v1471, 1.0
        %v1541 = vadd.f32 %v1486, 1.0
        %v1542 = vadd.f32 %v1501, 1.0
        %v1543 = vadd.f32 %v1516, 1.0
        %v1544 = vadd.f32 %v1531, 1.0
        %v1545 = vmul.f32 %v1259, %v505
        %v1546 = vmul.f32 %v1260, %v506
        %v1547 = vmul.f32 %v1261, %v507
        %v1548 = vmul.f32 %v1262, %v508
        %v1549 = vmul.f32 %v1263, %v509
        %v1550 = vmul.f32 %v1264, %v510
        %v1551 = vmul.f32 %v1265, %v511
        %v1552 = vmul.f32 %v1266, %v512
        %v1553 = vmul.f32 %v1267, %v513
        %v1554 = vmul.f32 %v1268, %v514
        %v1555 = vmul.f32 %v1269, %v515
        %v1556 = vmul.f32 %v1270, %v516
        %v1557 = vmul.f32 %v1271, %v517
        %1558 = vst [vmem:[%s477] sm:$0xff] %v1545
        %1559 = vst [vmem:[%s477 + $0x8] sm:$0xff] %v1546
        %1560 = vst [vmem:[%s477 + $0x10] sm:$0xff] %v1547
        %1561 = vst [vmem:[%s477 + $0x18] sm:$0xff] %v1548
        %1562 = vst [vmem:[%s477 + $0x20] sm:$0xff] %v1549
        %1563 = vst [vmem:[%s477 + $0x28] sm:$0xff] %v1550
        %1564 = vst [vmem:[%s477 + $0x30] sm:$0xff] %v1551
        %1565 = vst [vmem:[%s477 + $0x38] sm:$0xff] %v1552
        %1566 = vst [vmem:[%s477 + $0x40] sm:$0xff] %v1553
        %1567 = vst [vmem:[%s477 + $0x48] sm:$0xff] %v1554
        %1568 = vst [vmem:[%s477 + $0x50] sm:$0xff] %v1555
        %1569 = vst [vmem:[%s477 + $0x58] sm:$0xff] %v1556
        %1570 = vst [vmem:[%s477 + $0x60] sm:$0xff] %v1557
        %v1571 = vmul.f32 %v1532, %v505
        %v1572 = vmul.f32 %v1533, %v506
        %v1573 = vmul.f32 %v1534, %v507
        %v1574 = vmul.f32 %v1535, %v508
        %v1575 = vmul.f32 %v1536, %v509
        %v1576 = vmul.f32 %v1537, %v510
        %v1577 = vmul.f32 %v1538, %v511
        %v1578 = vmul.f32 %v1539, %v512
        %v1579 = vmul.f32 %v1540, %v513
        %v1580 = vmul.f32 %v1541, %v514
        %v1581 = vmul.f32 %v1542, %v515
        %v1582 = vmul.f32 %v1543, %v516
        %v1583 = vmul.f32 %v1544, %v517
        %1584 = vst [vmem:[%s484] sm:$0xff] %v1571
        %1585 = vst [vmem:[%s484 + $0x8] sm:$0xff] %v1572
        %1586 = vst [vmem:[%s484 + $0x10] sm:$0xff] %v1573
        %1587 = vst [vmem:[%s484 + $0x18] sm:$0xff] %v1574
        %1588 = vst [vmem:[%s484 + $0x20] sm:$0xff] %v1575
        %1589 = vst [vmem:[%s484 + $0x28] sm:$0xff] %v1576
        %1590 = vst [vmem:[%s484 + $0x30] sm:$0xff] %v1577
        %1591 = vst [vmem:[%s484 + $0x38] sm:$0xff] %v1578
        %1592 = vst [vmem:[%s484 + $0x40] sm:$0xff] %v1579
        %1593 = vst [vmem:[%s484 + $0x48] sm:$0xff] %v1580
        %1594 = vst [vmem:[%s484 + $0x50] sm:$0xff] %v1581
        %1595 = vst [vmem:[%s484 + $0x58] sm:$0xff] %v1582
        %1596 = vst [vmem:[%s484 + $0x60] sm:$0xff] %v1583
        %v1597 = vmul.f32 %v1532, %v518
        %v1598 = vmul.f32 %v1533, %v519
        %v1599 = vmul.f32 %v1534, %v520
        %v1600 = vmul.f32 %v1535, %v521
        %v1601 = vmul.f32 %v1536, %v522
        %v1602 = vmul.f32 %v1537, %v523
        %v1603 = vmul.f32 %v1538, %v524
        %v1604 = vmul.f32 %v1539, %v525
        %v1605 = vmul.f32 %v1540, %v526
        %v1606 = vmul.f32 %v1541, %v527
        %v1607 = vmul.f32 %v1542, %v528
        %v1608 = vmul.f32 %v1543, %v529
        %v1609 = vmul.f32 %v1544, %v530
        %1610 = vst [vmem:[%s491] sm:$0xff] %v1597
        %1611 = vst [vmem:[%s491 + $0x8] sm:$0xff] %v1598
        %1612 = vst [vmem:[%s491 + $0x10] sm:$0xff] %v1599
        %1613 = vst [vmem:[%s491 + $0x18] sm:$0xff] %v1600
        %1614 = vst [vmem:[%s491 + $0x20] sm:$0xff] %v1601
        %1615 = vst [vmem:[%s491 + $0x28] sm:$0xff] %v1602
        %1616 = vst [vmem:[%s491 + $0x30] sm:$0xff] %v1603
        %1617 = vst [vmem:[%s491 + $0x38] sm:$0xff] %v1604
        %1618 = vst [vmem:[%s491 + $0x40] sm:$0xff] %v1605
        %1619 = vst [vmem:[%s491 + $0x48] sm:$0xff] %v1606
        %1620 = vst [vmem:[%s491 + $0x50] sm:$0xff] %v1607
        %1621 = vst [vmem:[%s491 + $0x58] sm:$0xff] %v1608
        %1622 = vst [vmem:[%s491 + $0x60] sm:$0xff] %v1609
        %v1623 = vmul.f32 %v1259, %v518
        %v1624 = vmul.f32 %v1260, %v519
        %v1625 = vmul.f32 %v1261, %v520
        %v1626 = vmul.f32 %v1262, %v521
        %v1627 = vmul.f32 %v1263, %v522
        %v1628 = vmul.f32 %v1264, %v523
        %v1629 = vmul.f32 %v1265, %v524
        %v1630 = vmul.f32 %v1266, %v525
        %v1631 = vmul.f32 %v1267, %v526
        %v1632 = vmul.f32 %v1268, %v527
        %v1633 = vmul.f32 %v1269, %v528
        %v1634 = vmul.f32 %v1270, %v529
        %v1635 = vmul.f32 %v1271, %v530
        %1636 = vst [vmem:[%s498] sm:$0xff] %v1623
        %1637 = vst [vmem:[%s498 + $0x8] sm:$0xff] %v1624
        %1638 = vst [vmem:[%s498 + $0x10] sm:$0xff] %v1625
        %1639 = vst [vmem:[%s498 + $0x18] sm:$0xff] %v1626
        %1640 = vst [vmem:[%s498 + $0x20] sm:$0xff] %v1627
        %1641 = vst [vmem:[%s498 + $0x28] sm:$0xff] %v1628
        %1642 = vst [vmem:[%s498 + $0x30] sm:$0xff] %v1629
        %1643 = vst [vmem:[%s498 + $0x38] sm:$0xff] %v1630
        %1644 = vst [vmem:[%s498 + $0x40] sm:$0xff] %v1631
        %1645 = vst [vmem:[%s498 + $0x48] sm:$0xff] %v1632
        %1646 = vst [vmem:[%s498 + $0x50] sm:$0xff] %v1633
        %1647 = vst [vmem:[%s498 + $0x58] sm:$0xff] %v1634
        %1648 = vst [vmem:[%s498 + $0x60] sm:$0xff] %v1635
        %s1649 = sand.u32 %s203, 1
        %s1650 = scalar_lea.sflag [#allocation4], %s1649
        %s1651 = sand.u32 %s203, 1
        %s1652 = smul.addr %s1651, 104
        %s1653 = scalar_lea.vmem [#allocation11], %s1652
        %s1654 = sand.u32 %s38, 1
        %s1655 = scalar_lea.sflag [#allocation13], %s1654
        %s1656 = sand.u32 %s229, 1
        %s1657 = smul.addr %s1656, 104
        %s1658 = scalar_lea.vmem [#allocation12], %s1657
        %s1659 = sand.u32 %s38, 1
        %s1660 = scalar_lea.sflag [#allocation13], %s1659
        %s1661 = sand.u32 %s255, 1
        %s1662 = smul.addr %s1661, 104
        %s1663 = scalar_lea.vmem [#allocation14], %s1662
        %s1664 = sand.u32 %s281, 1
        %s1665 = scalar_lea.sflag [#allocation16], %s1664
        %s1666 = sand.u32 %s281, 1
        %s1667 = smul.addr %s1666, 104
        %s1668 = scalar_lea.vmem [#allocation15], %s1667
        // Predicated region
        $region69: #{tpu_custom_call.1} parent=47 // pred_check
          %p1669 = pneg %p213
        $region70: #{tpu_custom_call.1} parent=47 // pred_check_branch
          %1671 = sbr.rel (%p1669) target = $region72
        $region71: #{tpu_custom_call.1} parent=47 // pred_region
          %s1672 = smul.u32 13, %s38
          %1674 = vsyncadd %s1650, 0
          %s1675 = smul.addr %s1672, 8
          %s1676 = scalar_lea.hbm %s7, %s1675
          %s1677 = sshll.u32 %s1653, 4
          %s1678 = int_to_ptr.vmem [resolvable:$true] %s1677
          %s1679 = sshll.u32 %s1676, 4
          %s1680 = int_to_ptr.hbm [resolvable:$true] %s1679
          %1685 = dma.vmem_to_hbm [thread:$0]  %s1678, 1664, %s1680, %s1650, 128, 128, 8
        $region72: #{tpu_custom_call.1} parent=47 // pred_fallthru
          _
        // Predicated region
        $region73: #{tpu_custom_call.1} parent=47 // pred_check
          %p1686 = pneg %p239
        $region74: #{tpu_custom_call.1} parent=47 // pred_check_branch
          %1688 = sbr.rel (%p1686) target = $region76
        $region75: #{tpu_custom_call.1} parent=47 // pred_region
          %s1689 = smul.u32 13, %s38
          %1691 = vsyncadd %s1655, 0
          %s1692 = smul.addr %s1689, 8
          %s1693 = scalar_lea.hbm %s8, %s1692
          %s1694 = sshll.u32 %s1658, 4
          %s1695 = int_to_ptr.vmem [resolvable:$true] %s1694
          %s1696 = sshll.u32 %s1693, 4
          %s1697 = int_to_ptr.hbm [resolvable:$true] %s1696
          %1702 = dma.vmem_to_hbm [thread:$0]  %s1695, 1664, %s1697, %s1655, 128, 128, 8
        $region76: #{tpu_custom_call.1} parent=47 // pred_fallthru
          _
        // Predicated region
        $region77: #{tpu_custom_call.1} parent=47 // pred_check
          %p1703 = pneg %p265
        $region78: #{tpu_custom_call.1} parent=47 // pred_check_branch
          %1705 = sbr.rel (%p1703) target = $region80
        $region79: #{tpu_custom_call.1} parent=47 // pred_region
          %s1706 = smul.u32 13, %s38
          %1708 = vsyncadd %s1660, 0
          %s1709 = smul.addr %s1706, 8
          %s1710 = scalar_lea.hbm %s9, %s1709
          %s1711 = sshll.u32 %s1663, 4
          %s1712 = int_to_ptr.vmem [resolvable:$true] %s1711
          %s1713 = sshll.u32 %s1710, 4
          %s1714 = int_to_ptr.hbm [resolvable:$true] %s1713
          %1719 = dma.vmem_to_hbm [thread:$0]  %s1712, 1664, %s1714, %s1660, 128, 128, 8
        $region80: #{tpu_custom_call.1} parent=47 // pred_fallthru
          _
        // Predicated region
        $region81: #{tpu_custom_call.1} parent=47 // pred_check
          %p1720 = pneg %p291
        $region82: #{tpu_custom_call.1} parent=47 // pred_check_branch
          %1722 = sbr.rel (%p1720) target = $region84
        $region83: #{tpu_custom_call.1} parent=47 // pred_region
          %s1723 = smul.u32 13, %s38
          %1725 = vsyncadd %s1665, 0
          %s1726 = smul.addr %s1723, 8
          %s1727 = scalar_lea.hbm %s10, %s1726
          %s1728 = sshll.u32 %s1668, 4
          %s1729 = int_to_ptr.vmem [resolvable:$true] %s1728
          %s1730 = sshll.u32 %s1727, 4
          %s1731 = int_to_ptr.hbm [resolvable:$true] %s1730
          %1736 = dma.vmem_to_hbm [thread:$0]  %s1729, 1664, %s1731, %s1665, 128, 128, 8
        $region84: #{tpu_custom_call.1} parent=47 // pred_fallthru
          _
      $region48: #{tpu_custom_call.1} parent=5 // pred_fallthru
        _
      %p1737 = scmp.le.s32.totalorder 2, %s33
      // Predicated region
      $region85: #{tpu_custom_call.1} parent=5 // pred_check
        %p1738 = pneg %p1737
      $region86: #{tpu_custom_call.1} parent=5 // pred_check_branch
        %1740 = sbr.rel (%p1738) target = $region88
      $region87: #{tpu_custom_call.1} parent=5 // pred_region
        %s1741 = ssub.s32 %s33, 2
        // Predicated region
        $region89: #{tpu_custom_call.1} parent=87 // pred_check
          %p1742 = pneg %p219
        $region90: #{tpu_custom_call.1} parent=87 // pred_check_branch
          %1744 = sbr.rel (%p1742) target = $region92
        $region91: #{tpu_custom_call.1} parent=87 // pred_region
          %s1745 = sand.u32 %s204, 1
          %s1746 = scalar_lea.sflag [#allocation4], %s1745
          %s1747 = sand.u32 %s204, 1
          %s1748 = smul.addr %s1747, 104
          %s1749 = scalar_lea.vmem [#allocation11], %s1748
          %1751 = dma.done %s1746, 1664
        $region92: #{tpu_custom_call.1} parent=87 // pred_fallthru
          _
        // Predicated region
        $region93: #{tpu_custom_call.1} parent=87 // pred_check
          %p1752 = pneg %p245
        $region94: #{tpu_custom_call.1} parent=87 // pred_check_branch
          %1754 = sbr.rel (%p1752) target = $region96
        $region95: #{tpu_custom_call.1} parent=87 // pred_region
          %s1755 = sand.u32 %s39, 1
          %s1756 = scalar_lea.sflag [#allocation13], %s1755
          %s1757 = sand.u32 %s230, 1
          %s1758 = smul.addr %s1757, 104
          %s1759 = scalar_lea.vmem [#allocation12], %s1758
          %1761 = dma.done %s1756, 1664
        $region96: #{tpu_custom_call.1} parent=87 // pred_fallthru
          _
        // Predicated region
        $region97: #{tpu_custom_call.1} parent=87 // pred_check
          %p1762 = pneg %p271
        $region98: #{tpu_custom_call.1} parent=87 // pred_check_branch
          %1764 = sbr.rel (%p1762) target = $region100
        $region99: #{tpu_custom_call.1} parent=87 // pred_region
          %s1765 = sand.u32 %s39, 1
          %s1766 = scalar_lea.sflag [#allocation13], %s1765
          %s1767 = sand.u32 %s256, 1
          %s1768 = smul.addr %s1767, 104
          %s1769 = scalar_lea.vmem [#allocation14], %s1768
          %1771 = dma.done %s1766, 1664
        $region100: #{tpu_custom_call.1} parent=87 // pred_fallthru
          _
        // Predicated region
        $region101: #{tpu_custom_call.1} parent=87 // pred_check
          %p1772 = pneg %p297
        $region102: #{tpu_custom_call.1} parent=87 // pred_check_branch
          %1774 = sbr.rel (%p1772) target = $region104
        $region103: #{tpu_custom_call.1} parent=87 // pred_region
          %s1775 = sand.u32 %s282, 1
          %s1776 = scalar_lea.sflag [#allocation16], %s1775
          %s1777 = sand.u32 %s282, 1
          %s1778 = smul.addr %s1777, 104
          %s1779 = scalar_lea.vmem [#allocation15], %s1778
          %1781 = dma.done %s1776, 1664
        $region104: #{tpu_custom_call.1} parent=87 // pred_fallthru
          _
      $region88: #{tpu_custom_call.1} parent=5 // pred_fallthru
        _
    $region6: #{tpu_custom_call.1} parent=1 // loop_footer
      %s37 = sadd.s32 1, %s33
    $region7: #{tpu_custom_call.1} parent=1 // loop_footer_branch
      %32 = sbr.rel target = $region3
    $region8: #{tpu_custom_call.1} parent=1 // loop_exit
      _
    %1782 = vsyncpa [#allocation3], 1
    %s1783 = scalar_lea.sflag [#allocation3], 1
    %1784 = vsyncpa %s1783, 1
    %1785 = vsyncpa [#allocation6], 1
    %s1786 = scalar_lea.sflag [#allocation6], 1
    %1787 = vsyncpa %s1786, 1
    %1788 = vsyncpa [#allocation9], 1
    %1789 = vsyncpa [#allocation4], 1
    %s1790 = scalar_lea.sflag [#allocation4], 1
    %1791 = vsyncpa %s1790, 1
    %1792 = vsyncpa [#allocation13], 1
    %s1793 = scalar_lea.sflag [#allocation13], 1
    %1794 = vsyncpa %s1793, 1
    %1795 = vsyncpa [#allocation16], 1
    %s1796 = scalar_lea.sflag [#allocation16], 1
    %1797 = vsyncpa %s1796, 1

</llo_original>
